<compile_context>
chip_gen: v7x
topology: tpu7x:2x2x1
jax: 0.10.0
libtpu: 0.0.40
codegen_flags: <defaults>
</compile_context>

<pallas_src>
import jax
import jax.numpy as jnp
from jax.experimental import pallas as pl
from jax.experimental.pallas import tpu as pltpu

_MASK_NEG = -1e9


def _round_up(x, m):
    return ((x + m - 1) // m) * m


def _tail_kernel(bert_ref, wemb_ref, chemb_ref, cmask_ref, pmask_ref,
                 w_word_ref, b_word_ref, w_conv_ref, b_conv_ref,
                 out_ref, pooled_ref, scores_ref):
    """Fused word-linear + char-conv1d + masked max-pool + attention + sum.

    bert_ref   : (TM, H)             bf16   BERT sequence embeddings (query)
    wemb_ref   : (TM, W)             bf16   word embeddings
    chemb_ref  : (P, C, TM, 3*PC)    bf16   im2col char-window embeddings
    cmask_ref  : (P, TM, C)          bf16   char mask (1 = real char)
    pmask_ref  : (TM, P)             f32    pinyin-slot mask (1 = real slot)
    w_word_ref : (W, H) bf16, b_word_ref: (1, H) f32
    w_conv_ref : (3*PC, H) bf16 (packed taps), b_conv_ref: (1, H) f32
    out_ref    : (TM, H)             f32
    pooled_ref : (P, TM, H)          f32    VMEM scratch (pooled per slot)
    scores_ref : (TM, P)             f32    VMEM scratch (attention logits)
    """
    P, C, TM, K3 = chemb_ref.shape
    H = out_ref.shape[-1]

    bert = bert_ref[...].astype(jnp.float32)                         # (TM, H)

    # word2bert linear: one MXU call, bf16 operands, f32 accumulation.
    word2bert = jnp.dot(wemb_ref[...], w_word_ref[...],
                        preferred_element_type=jnp.float32) + b_word_ref[...]

    w_conv = w_conv_ref[...]                                          # (3*PC, H)
    b_conv = b_conv_ref[...]                                          # (1, H)

    # P is small (<= ~10): slot loop stays unrolled; per-slot live state is
    # bounded because the pooled activations are spilled to the VMEM scratch.
    for p in range(P):
        # Fused conv: all C char positions folded into M, all 3 taps folded
        # into K -> one (C*TM, 3*PC) @ (3*PC, H) matmul per pinyin slot.
        x = chemb_ref[p].reshape(C * TM, K3)
        y = jnp.dot(x, w_conv, preferred_element_type=jnp.float32)    # (C*TM, H)
        y = y.reshape(C, TM, H)

        # additive char-mask bias: 0 for real chars, -1e9 for PAD chars.
        cbias = (cmask_ref[p].astype(jnp.float32) - 1.0) * jnp.float32(1e9)

        pooled = y[0] + cbias[:, 0:1]
        for c in range(1, C):
            pooled = jnp.maximum(pooled, y[c] + cbias[:, c:c + 1])
        pooled = pooled + b_conv                     # conv bias hoisted past max
        pooled_ref[p] = pooled

        # unscaled dot-product attention logit for this pinyin slot.
        # TODO(synk): the original dot_product_attention is assumed unscaled
        # (no 1/sqrt(H)); verify against the PyTorch helper if it scales.
        scores_ref[:, p:p + 1] = jnp.sum(pooled * bert, axis=-1, keepdims=True)

    # masked softmax over the pinyin-slot axis (replace form, like the module).
    scores = jnp.where(pmask_ref[...] > 0, scores_ref[...],
                       jnp.float32(_MASK_NEG))                        # (TM, P)
    m = jnp.max(scores, axis=-1, keepdims=True)
    e = jnp.exp(scores - m)
    denom = jnp.sum(e, axis=-1, keepdims=True)
    w = e * pl.reciprocal(denom, approx=False)       # exact; called once per tile

    att = jnp.zeros((TM, H), jnp.float32)
    for p in range(P):
        att = att + w[:, p:p + 1] * pooled_ref[p]

    out_ref[...] = bert + word2bert + att


def bert_wlf_pinyin_char_encoder_tail(
        bert_seq_embed,          # (B, L, H) f32   BERT output (query)
        seqs_word_embedding,     # (B, L, W) f32
        seqs_pinyin_char_ids,    # (B, L, P, C) int
        att_pinyin_char_mask,    # (B, L, P, C) int (1 = real char)
        pinyin_char_table,       # (V, PC) f32     nn.Embedding weight
        w_word, b_word,          # nn.Linear layout: (H, W), (H,)
        w_conv, b_conv,          # nn.Conv1d layout: (H, PC, 3), (H,)
        *, pad_id=0, tile_m=256, compute_dtype=jnp.bfloat16):
    """Runs the fused encoder tail.  Returns (B, L, H) float32.

    tile_m=256 is a safe default on all generations (v7x has 64 MiB VMEM);
    raise to 512 on v5e/v6e (128 MiB VMEM) for a few extra percent.
    """
    B, L, H = bert_seq_embed.shape
    W = seqs_word_embedding.shape[-1]
    P, C = seqs_pinyin_char_ids.shape[2:]
    PC = pinyin_char_table.shape[-1]
    N = B * L

    tm = _round_up(min(tile_m, N), 8)
    n_pad = _round_up(N, tm)
    pad = n_pad - N

    def pad_rows(x, axis=0, value=0):
        if pad == 0:
            return x
        cfg = [(0, 0)] * x.ndim
        cfg[axis] = (0, pad)
        return jnp.pad(x, cfg, constant_values=value)

    bert_flat = pad_rows(bert_seq_embed.reshape(N, H)).astype(compute_dtype)
    wemb_flat = pad_rows(seqs_word_embedding.reshape(N, W)).astype(compute_dtype)

    # pinyin char embedding table in bf16 with a hard-zero PAD row
    # (nn.Embedding(padding_idx=...) semantics).  The gather produces the
    # kernel's (P, C, N, 3*PC) im2col-window layout directly: boundary windows
    # pick PAD ids, whose zero row reproduces the conv's zero padding.
    table = pinyin_char_table.astype(compute_dtype).at[pad_id].set(0)

    ids = jnp.transpose(seqs_pinyin_char_ids.reshape(N, P, C), (1, 2, 0))  # (P,C,N)
    ids = pad_rows(ids, axis=2, value=pad_id)
    ids_pad = jnp.pad(ids, ((0, 0), (1, 1), (0, 0)), constant_values=pad_id)
    win_ids = jnp.stack([ids_pad[:, k:k + C, :] for k in range(3)], axis=-1)
    chemb_win = jnp.take(table, win_ids, axis=0).reshape(P, C, n_pad, 3 * PC)

    cmask = jnp.transpose(att_pinyin_char_mask.reshape(N, P, C), (1, 0, 2))
    cmask = pad_rows(cmask, axis=1).astype(compute_dtype)                  # (P,n,C)

    # module: slot valid <=> mask's first char column != PAD id (quirk kept).
    pmask = (att_pinyin_char_mask[..., 0] != pad_id).reshape(N, P)
    pmask = pad_rows(pmask.astype(jnp.float32))                            # (n, P)

    w_word_k = jnp.transpose(w_word).astype(compute_dtype)                 # (W, H)
    b_word_k = b_word.reshape(1, H).astype(jnp.float32)
    # pack the 3 conv taps into one (3*PC, H) slab: index (k*PC + e, h).
    w_conv_k = jnp.transpose(w_conv, (2, 1, 0)).reshape(3 * PC, H).astype(compute_dtype)
    b_conv_k = b_conv.reshape(1, H).astype(jnp.float32)

    # rough per-step VMEM footprint: 2x double-buffered blocks + scratches +
    # live f32 intermediates (conv result + a handful of (tm, H) temporaries).
    blk = (tm * H * 2 + tm * W * 2 + P * C * tm * 3 * PC * 2 + P * tm * C * 2
           + tm * P * 4 + W * H * 2 + 3 * PC * H * 2 + 2 * H * 4 + tm * H * 4)
    est = 2 * blk + P * tm * H * 4 + tm * P * 4 + (C + 8) * tm * H * 4
    vmem_limit = int(min(est * 1.25 + (8 << 20), 96 << 20))   # stays < 64 MiB at tm=256

    out = pl.pallas_call(
        _tail_kernel,
        out_shape=jax.ShapeDtypeStruct((n_pad, H), jnp.float32),
        grid_spec=pltpu.PrefetchScalarGridSpec(
            num_scalar_prefetch=0,
            grid=(n_pad // tm,),
            in_specs=[
                pl.BlockSpec((tm, H), lambda i: (i, 0)),                   # bert
                pl.BlockSpec((tm, W), lambda i: (i, 0)),                   # word emb
                pl.BlockSpec((P, C, tm, 3 * PC), lambda i: (0, 0, i, 0)),  # char win
                pl.BlockSpec((P, tm, C), lambda i: (0, i, 0)),             # char mask
                pl.BlockSpec((tm, P), lambda i: (i, 0)),                   # slot mask
                pl.BlockSpec((W, H), lambda i: (0, 0)),                    # W_word
                pl.BlockSpec((1, H), lambda i: (0, 0)),                    # b_word
                pl.BlockSpec((3 * PC, H), lambda i: (0, 0)),               # W_conv
                pl.BlockSpec((1, H), lambda i: (0, 0)),                    # b_conv
            ],
            out_specs=pl.BlockSpec((tm, H), lambda i: (i, 0)),
            scratch_shapes=[pltpu.VMEM((P, tm, H), jnp.float32),
                            pltpu.VMEM((tm, P), jnp.float32)],
        ),
        compiler_params=pltpu.CompilerParams(
            dimension_semantics=("parallel",),
            vmem_limit_bytes=vmem_limit),
    )(bert_flat, wemb_flat, chemb_win, cmask, pmask,
      w_word_k, b_word_k, w_conv_k, b_conv_k)

    return out[:N].reshape(B, L, H)


def _reference(bert, wemb, chemb, char_mask, slot_mask,
               w_word, b_word, w_conv, b_conv):
    """Pure-JAX reference of the same forward tail (f32)."""
    # TODO(synk): exact masked_singlekernel_conv1d / dot_product_attention sources
    # are not in the spec; assumed: zero-masked input -> Conv1d(k=3, pad=1) ->
    # mask(-1e9) -> max-pool over chars, and unscaled dot-product attention.
    word2bert = jnp.einsum('blw,hw->blh', wemb, w_word) + b_word
    C = chemb.shape[3]
    x_pad = jnp.pad(chemb, ((0, 0), (0, 0), (0, 0), (1, 1), (0, 0)))
    conv = jnp.zeros(chemb.shape[:-1] + (w_conv.shape[0],), jnp.float32) + b_conv
    for k in range(3):
        conv = conv + jnp.einsum('blpce,he->blpch',
                                 x_pad[:, :, :, k:k + C, :], w_conv[:, :, k])
    conv = conv + jnp.where(char_mask == 0, _MASK_NEG, 0.0)[..., None]
    pooled = jnp.max(conv, axis=-2)                                    # (B, L, P, H)
    scores = jnp.einsum('blph,blh->blp', pooled, bert)
    scores = jnp.where(slot_mask == 0, _MASK_NEG, scores)
    weights = jax.nn.softmax(scores, axis=-1)
    att = jnp.einsum('blp,blph->blh', weights, pooled)
    return bert + word2bert + att


if __name__ == "__main__":
    # small, module-consistent shapes
    B, L = 2, 20          # batch, sequence length
    H = 32                # bert hidden_size
    W = 16                # word_size
    PC = 16               # pinyin_char_size
    P = 4                 # max_pinyin_num_of_token
    C = 8                 # max_pinyin_char_length
    TOKEN_VOCAB, CHAR_VOCAB, CHAR_PAD = 100, 30, 0

    key = jax.random.PRNGKey(0)
    (k_tok, k_chr, k_ww, k_bw, k_wc, k_bc,
     k_ids, k_wemb, k_len, k_slot, k_cid) = jax.random.split(key, 11)

    # TODO(synk): the pretrained BertModel forward has no in-script equivalent;
    # a deterministic token-embedding lookup stands in for bert_seq_embed.
    token_table = 0.1 * jax.random.normal(k_tok, (TOKEN_VOCAB, H), jnp.float32)
    # pinyin char nn.Embedding with padding_idx -> PAD row zeroed
    char_table = 0.1 * jax.random.normal(k_chr, (CHAR_VOCAB, PC), jnp.float32)
    char_table = char_table.at[CHAR_PAD].set(0.0)

    w_word = 0.1 * jax.random.normal(k_ww, (H, W), jnp.float32)      # nn.Linear layout
    b_word = 0.1 * jax.random.normal(k_bw, (H,), jnp.float32)
    w_conv = 0.1 * jax.random.normal(k_wc, (H, PC, 3), jnp.float32)  # nn.Conv1d layout
    b_conv = 0.1 * jax.random.normal(k_bc, (H,), jnp.float32)

    seqs_token_ids = jax.random.randint(k_ids, (B, L), 0, TOKEN_VOCAB)
    seqs_word_embedding = 0.1 * jax.random.normal(k_wemb, (B, L, W), jnp.float32)
    att_token_mask = jnp.ones((B, L), jnp.int32)   # (unused by the stand-in BERT)

    # pinyin char ids with realistic trailing padding (>=1 slot, >=1 char per token)
    n_slots = jax.random.randint(k_slot, (B, L), 1, P + 1)
    char_len = jax.random.randint(k_len, (B, L, P), 1, C + 1)
    slot_used = jnp.arange(P)[None, None, :] < n_slots[..., None]
    char_valid = (jnp.arange(C)[None, None, None, :] < char_len[..., None]) \
        & slot_used[..., None]
    raw_ids = jax.random.randint(k_cid, (B, L, P, C), 1, CHAR_VOCAB)
    seqs_pinyin_char_ids = jnp.where(char_valid, raw_ids, CHAR_PAD)
    att_pinyin_char_mask = (seqs_pinyin_char_ids != CHAR_PAD).astype(jnp.int32)

    # glue: BERT stand-in (token-embedding lookup)
    bert_seq_embed = jnp.take(token_table, seqs_token_ids, axis=0)           # (B, L, H)

    out = bert_wlf_pinyin_char_encoder_tail(
        bert_seq_embed, seqs_word_embedding, seqs_pinyin_char_ids,
        att_pinyin_char_mask, char_table,
        w_word, b_word, w_conv, b_conv,
        pad_id=CHAR_PAD,
        tile_m=16)  # tiny tile for the toy shapes; default 256 (v7x) / 512 (v5e,v6e)
    out = jax.block_until_ready(out)

    # reference on the same bf16-quantized operands the kernel consumes
    q = lambda a: a.astype(jnp.bfloat16).astype(jnp.float32)
    chemb_ref_in = jnp.take(q(char_table), seqs_pinyin_char_ids, axis=0)  # (B,L,P,C,PC)
    pinyin_slot_mask = (att_pinyin_char_mask[..., 0] != CHAR_PAD).astype(jnp.int32)
    ref = _reference(q(bert_seq_embed), q(seqs_word_embedding), chemb_ref_in,
                     att_pinyin_char_mask, pinyin_slot_mask,
                     q(w_word), b_word, q(w_conv), b_conv)

    assert out.shape == (B, L, H)
    err = float(jnp.max(jnp.abs(out - ref)))
    assert jnp.allclose(out, ref, rtol=1e-2, atol=1e-2), \
        f"mismatch vs reference, max abs err={err}"

    print("KERNEL_OK")
</pallas_src>

<mosaic_0001>
module attributes {stable_mosaic.version = 11 : i64} {
  func.func @_tail_kernel(%arg0: i32, %arg1: memref<16x32xbf16, #tpu.memory_space<vmem>>, %arg2: memref<16x16xbf16, #tpu.memory_space<vmem>>, %arg3: memref<4x8x16x48xbf16, #tpu.memory_space<vmem>>, %arg4: memref<4x16x8xbf16, #tpu.memory_space<vmem>>, %arg5: memref<16x4xf32, #tpu.memory_space<vmem>>, %arg6: memref<16x32xbf16, #tpu.memory_space<vmem>>, %arg7: memref<1x32xf32, #tpu.memory_space<vmem>>, %arg8: memref<48x32xbf16, #tpu.memory_space<vmem>>, %arg9: memref<1x32xf32, #tpu.memory_space<vmem>>, %arg10: memref<16x32xf32, #tpu.memory_space<vmem>>, %arg11: memref<4x16x32xf32, #tpu.memory_space<vmem>>, %arg12: memref<16x4xf32, #tpu.memory_space<vmem>>) attributes {dimension_semantics = [#tpu.dimension_semantics<parallel>], iteration_bounds = array<i64: 3>, scalar_prefetch = 0 : i64, scratch_operands = 2 : i64, tpu.core_type = #tpu.core_type<tc>, window_params = [{transform_indices = @transform_0, window_bounds = array<i64: 16, 32>}, {transform_indices = @transform_1, window_bounds = array<i64: 16, 16>}, {transform_indices = @transform_2, window_bounds = array<i64: 4, 8, 16, 48>}, {transform_indices = @transform_3, window_bounds = array<i64: 4, 16, 8>}, {transform_indices = @transform_4, window_bounds = array<i64: 16, 4>}, {pipeline_mode = #tpu.pipeline_mode<synchronous>, transform_indices = @transform_5, window_bounds = array<i64: 16, 32>}, {pipeline_mode = #tpu.pipeline_mode<synchronous>, transform_indices = @transform_6, window_bounds = array<i64: 1, 32>}, {pipeline_mode = #tpu.pipeline_mode<synchronous>, transform_indices = @transform_7, window_bounds = array<i64: 48, 32>}, {pipeline_mode = #tpu.pipeline_mode<synchronous>, transform_indices = @transform_8, window_bounds = array<i64: 1, 32>}, {transform_indices = @transform_9, window_bounds = array<i64: 16, 32>}]} {
    %c0 = arith.constant 0 : index
    %c0_0 = arith.constant 0 : index
    %0 = vector.load %arg1[%c0, %c0_0] : memref<16x32xbf16, #tpu.memory_space<vmem>>, vector<16x32xbf16>
    %1 = arith.extf %0 : vector<16x32xbf16> to vector<16x32xf32>
    %c0_1 = arith.constant 0 : index
    %c0_2 = arith.constant 0 : index
    %2 = vector.load %arg2[%c0_1, %c0_2] : memref<16x16xbf16, #tpu.memory_space<vmem>>, vector<16x16xbf16>
    %c0_3 = arith.constant 0 : index
    %c0_4 = arith.constant 0 : index
    %3 = vector.load %arg6[%c0_3, %c0_4] : memref<16x32xbf16, #tpu.memory_space<vmem>>, vector<16x32xbf16>
    %cst = arith.constant dense<0.000000e+00> : vector<16x32xf32>
    %4 = tpu.matmul %2, %3, %cst {dimension_numbers = #tpu.dot_dimension_numbers<[1], [0], [0], [1], [0, 0, 1, 1], [], []>} : vector<16x16xbf16>, vector<16x32xbf16>, vector<16x32xf32> -> vector<16x32xf32>
    %c0_5 = arith.constant 0 : index
    %c0_6 = arith.constant 0 : index
    %5 = vector.load %arg7[%c0_5, %c0_6] : memref<1x32xf32, #tpu.memory_space<vmem>>, vector<1x32xf32>
    %6 = vector.broadcast %5 : vector<1x32xf32> to vector<16x32xf32>
    %7 = arith.addf %4, %6 : vector<16x32xf32>
    %c0_7 = arith.constant 0 : index
    %c0_8 = arith.constant 0 : index
    %8 = vector.load %arg8[%c0_7, %c0_8] : memref<48x32xbf16, #tpu.memory_space<vmem>>, vector<48x32xbf16>
    %c0_9 = arith.constant 0 : index
    %c0_10 = arith.constant 0 : index
    %9 = vector.load %arg9[%c0_9, %c0_10] : memref<1x32xf32, #tpu.memory_space<vmem>>, vector<1x32xf32>
    %c0_11 = arith.constant 0 : index
    %c0_12 = arith.constant 0 : index
    %c0_13 = arith.constant 0 : index
    %c0_14 = arith.constant 0 : index
    %10 = vector.load %arg3[%c0_11, %c0_12, %c0_13, %c0_14] : memref<4x8x16x48xbf16, #tpu.memory_space<vmem>>, vector<1x8x16x48xbf16>
    %11 = vector.shape_cast %10 : vector<1x8x16x48xbf16> to vector<8x16x48xbf16>
    %12 = vector.shape_cast %11 : vector<8x16x48xbf16> to vector<128x48xbf16>
    %cst_15 = arith.constant dense<0.000000e+00> : vector<128x32xf32>
    %13 = tpu.matmul %12, %8, %cst_15 {dimension_numbers = #tpu.dot_dimension_numbers<[1], [0], [0], [1], [0, 0, 1, 1], [], []>} : vector<128x48xbf16>, vector<48x32xbf16>, vector<128x32xf32> -> vector<128x32xf32>
    %14 = vector.shape_cast %13 : vector<128x32xf32> to vector<8x16x32xf32>
    %c0_16 = arith.constant 0 : index
    %c0_17 = arith.constant 0 : index
    %c0_18 = arith.constant 0 : index
    %15 = vector.load %arg4[%c0_16, %c0_17, %c0_18] : memref<4x16x8xbf16, #tpu.memory_space<vmem>>, vector<1x16x8xbf16>
    %16 = vector.shape_cast %15 : vector<1x16x8xbf16> to vector<16x8xbf16>
    %17 = arith.extf %16 : vector<16x8xbf16> to vector<16x8xf32>
    %cst_19 = arith.constant 1.000000e+00 : f32
    %18 = vector.broadcast %cst_19 : f32 to vector<16x8xf32>
    %19 = arith.subf %17, %18 : vector<16x8xf32>
    %cst_20 = arith.constant 1.000000e+09 : f32
    %20 = vector.broadcast %cst_20 : f32 to vector<16x8xf32>
    %21 = arith.mulf %19, %20 : vector<16x8xf32>
    %22 = vector.extract_strided_slice %14 {offsets = [0, 0, 0], sizes = [1, 16, 32], strides = [1, 1, 1]} : vector<8x16x32xf32> to vector<1x16x32xf32>
    %23 = vector.shape_cast %22 : vector<1x16x32xf32> to vector<16x32xf32>
    %24 = vector.extract_strided_slice %21 {offsets = [0, 0], sizes = [16, 1], strides = [1, 1]} : vector<16x8xf32> to vector<16x1xf32>
    %25 = vector.broadcast %24 : vector<16x1xf32> to vector<16x32xf32>
    %26 = arith.addf %23, %25 : vector<16x32xf32>
    %27 = vector.extract_strided_slice %14 {offsets = [1, 0, 0], sizes = [1, 16, 32], strides = [1, 1, 1]} : vector<8x16x32xf32> to vector<1x16x32xf32>
    %28 = vector.shape_cast %27 : vector<1x16x32xf32> to vector<16x32xf32>
    %29 = vector.extract_strided_slice %21 {offsets = [0, 1], sizes = [16, 1], strides = [1, 1]} : vector<16x8xf32> to vector<16x1xf32>
    %30 = vector.broadcast %29 : vector<16x1xf32> to vector<16x32xf32>
    %31 = arith.addf %28, %30 : vector<16x32xf32>
    %32 = arith.maximumf %26, %31 : vector<16x32xf32>
    %33 = vector.extract_strided_slice %14 {offsets = [2, 0, 0], sizes = [1, 16, 32], strides = [1, 1, 1]} : vector<8x16x32xf32> to vector<1x16x32xf32>
    %34 = vector.shape_cast %33 : vector<1x16x32xf32> to vector<16x32xf32>
    %35 = vector.extract_strided_slice %21 {offsets = [0, 2], sizes = [16, 1], strides = [1, 1]} : vector<16x8xf32> to vector<16x1xf32>
    %36 = vector.broadcast %35 : vector<16x1xf32> to vector<16x32xf32>
    %37 = arith.addf %34, %36 : vector<16x32xf32>
    %38 = arith.maximumf %32, %37 : vector<16x32xf32>
    %39 = vector.extract_strided_slice %14 {offsets = [3, 0, 0], sizes = [1, 16, 32], strides = [1, 1, 1]} : vector<8x16x32xf32> to vector<1x16x32xf32>
    %40 = vector.shape_cast %39 : vector<1x16x32xf32> to vector<16x32xf32>
    %41 = vector.extract_strided_slice %21 {offsets = [0, 3], sizes = [16, 1], strides = [1, 1]} : vector<16x8xf32> to vector<16x1xf32>
    %42 = vector.broadcast %41 : vector<16x1xf32> to vector<16x32xf32>
    %43 = arith.addf %40, %42 : vector<16x32xf32>
    %44 = arith.maximumf %38, %43 : vector<16x32xf32>
    %45 = vector.extract_strided_slice %14 {offsets = [4, 0, 0], sizes = [1, 16, 32], strides = [1, 1, 1]} : vector<8x16x32xf32> to vector<1x16x32xf32>
    %46 = vector.shape_cast %45 : vector<1x16x32xf32> to vector<16x32xf32>
    %47 = vector.extract_strided_slice %21 {offsets = [0, 4], sizes = [16, 1], strides = [1, 1]} : vector<16x8xf32> to vector<16x1xf32>
    %48 = vector.broadcast %47 : vector<16x1xf32> to vector<16x32xf32>
    %49 = arith.addf %46, %48 : vector<16x32xf32>
    %50 = arith.maximumf %44, %49 : vector<16x32xf32>
    %51 = vector.extract_strided_slice %14 {offsets = [5, 0, 0], sizes = [1, 16, 32], strides = [1, 1, 1]} : vector<8x16x32xf32> to vector<1x16x32xf32>
    %52 = vector.shape_cast %51 : vector<1x16x32xf32> to vector<16x32xf32>
    %53 = vector.extract_strided_slice %21 {offsets = [0, 5], sizes = [16, 1], strides = [1, 1]} : vector<16x8xf32> to vector<16x1xf32>
    %54 = vector.broadcast %53 : vector<16x1xf32> to vector<16x32xf32>
    %55 = arith.addf %52, %54 : vector<16x32xf32>
    %56 = arith.maximumf %50, %55 : vector<16x32xf32>
    %57 = vector.extract_strided_slice %14 {offsets = [6, 0, 0], sizes = [1, 16, 32], strides = [1, 1, 1]} : vector<8x16x32xf32> to vector<1x16x32xf32>
    %58 = vector.shape_cast %57 : vector<1x16x32xf32> to vector<16x32xf32>
    %59 = vector.extract_strided_slice %21 {offsets = [0, 6], sizes = [16, 1], strides = [1, 1]} : vector<16x8xf32> to vector<16x1xf32>
    %60 = vector.broadcast %59 : vector<16x1xf32> to vector<16x32xf32>
    %61 = arith.addf %58, %60 : vector<16x32xf32>
    %62 = arith.maximumf %56, %61 : vector<16x32xf32>
    %63 = vector.extract_strided_slice %14 {offsets = [7, 0, 0], sizes = [1, 16, 32], strides = [1, 1, 1]} : vector<8x16x32xf32> to vector<1x16x32xf32>
    %64 = vector.shape_cast %63 : vector<1x16x32xf32> to vector<16x32xf32>
    %65 = vector.extract_strided_slice %21 {offsets = [0, 7], sizes = [16, 1], strides = [1, 1]} : vector<16x8xf32> to vector<16x1xf32>
    %66 = vector.broadcast %65 : vector<16x1xf32> to vector<16x32xf32>
    %67 = arith.addf %64, %66 : vector<16x32xf32>
    %68 = arith.maximumf %62, %67 : vector<16x32xf32>
    %69 = vector.broadcast %9 : vector<1x32xf32> to vector<16x32xf32>
    %70 = arith.addf %68, %69 : vector<16x32xf32>
    %c0_21 = arith.constant 0 : index
    %c0_22 = arith.constant 0 : index
    %c0_23 = arith.constant 0 : index
    %71 = vector.load %arg11[%c0_21, %c0_22, %c0_23] : memref<4x16x32xf32, #tpu.memory_space<vmem>>, vector<1x16x32xf32>
    %72 = vector.shape_cast %71 : vector<1x16x32xf32> to vector<16x32xf32>
    %73 = vector.shape_cast %70 : vector<16x32xf32> to vector<1x16x32xf32>
    tpu.vector_store %arg11[%c0_21, %c0_22, %c0_23], %73 {strides = array<i32>} : memref<4x16x32xf32, #tpu.memory_space<vmem>>, vector<1x16x32xf32>,
    %74 = arith.mulf %70, %1 : vector<16x32xf32>
    %cst_24 = arith.constant dense<0.000000e+00> : vector<16xf32>
    %75 = vector.multi_reduction <add>, %74, %cst_24 [1] : vector<16x32xf32> to vector<16xf32>
    %76 = vector.shape_cast %75 : vector<16xf32> to vector<16x1xf32>
    %c0_25 = arith.constant 0 : index
    %c0_26 = arith.constant 0 : index
    %77 = vector.load %arg12[%c0_25, %c0_26] : memref<16x4xf32, #tpu.memory_space<vmem>>, vector<16x1xf32>
    tpu.vector_store %arg12[%c0_25, %c0_26], %76 {strides = array<i32>} : memref<16x4xf32, #tpu.memory_space<vmem>>, vector<16x1xf32>,
    %c1 = arith.constant 1 : index
    %c0_27 = arith.constant 0 : index
    %c0_28 = arith.constant 0 : index
    %c0_29 = arith.constant 0 : index
    %78 = vector.load %arg3[%c1, %c0_27, %c0_28, %c0_29] : memref<4x8x16x48xbf16, #tpu.memory_space<vmem>>, vector<1x8x16x48xbf16>
    %79 = vector.shape_cast %78 : vector<1x8x16x48xbf16> to vector<8x16x48xbf16>
    %80 = vector.shape_cast %79 : vector<8x16x48xbf16> to vector<128x48xbf16>
    %cst_30 = arith.constant dense<0.000000e+00> : vector<128x32xf32>
    %81 = tpu.matmul %80, %8, %cst_30 {dimension_numbers = #tpu.dot_dimension_numbers<[1], [0], [0], [1], [0, 0, 1, 1], [], []>} : vector<128x48xbf16>, vector<48x32xbf16>, vector<128x32xf32> -> vector<128x32xf32>
    %82 = vector.shape_cast %81 : vector<128x32xf32> to vector<8x16x32xf32>
    %c1_31 = arith.constant 1 : index
    %c0_32 = arith.constant 0 : index
    %c0_33 = arith.constant 0 : index
    %83 = vector.load %arg4[%c1_31, %c0_32, %c0_33] : memref<4x16x8xbf16, #tpu.memory_space<vmem>>, vector<1x16x8xbf16>
    %84 = vector.shape_cast %83 : vector<1x16x8xbf16> to vector<16x8xbf16>
    %85 = arith.extf %84 : vector<16x8xbf16> to vector<16x8xf32>
    %cst_34 = arith.constant 1.000000e+00 : f32
    %86 = vector.broadcast %cst_34 : f32 to vector<16x8xf32>
    %87 = arith.subf %85, %86 : vector<16x8xf32>
    %cst_35 = arith.constant 1.000000e+09 : f32
    %88 = vector.broadcast %cst_35 : f32 to vector<16x8xf32>
    %89 = arith.mulf %87, %88 : vector<16x8xf32>
    %90 = vector.extract_strided_slice %82 {offsets = [0, 0, 0], sizes = [1, 16, 32], strides = [1, 1, 1]} : vector<8x16x32xf32> to vector<1x16x32xf32>
    %91 = vector.shape_cast %90 : vector<1x16x32xf32> to vector<16x32xf32>
    %92 = vector.extract_strided_slice %89 {offsets = [0, 0], sizes = [16, 1], strides = [1, 1]} : vector<16x8xf32> to vector<16x1xf32>
    %93 = vector.broadcast %92 : vector<16x1xf32> to vector<16x32xf32>
    %94 = arith.addf %91, %93 : vector<16x32xf32>
    %95 = vector.extract_strided_slice %82 {offsets = [1, 0, 0], sizes = [1, 16, 32], strides = [1, 1, 1]} : vector<8x16x32xf32> to vector<1x16x32xf32>
    %96 = vector.shape_cast %95 : vector<1x16x32xf32> to vector<16x32xf32>
    %97 = vector.extract_strided_slice %89 {offsets = [0, 1], sizes = [16, 1], strides = [1, 1]} : vector<16x8xf32> to vector<16x1xf32>
    %98 = vector.broadcast %97 : vector<16x1xf32> to vector<16x32xf32>
    %99 = arith.addf %96, %98 : vector<16x32xf32>
    %100 = arith.maximumf %94, %99 : vector<16x32xf32>
    %101 = vector.extract_strided_slice %82 {offsets = [2, 0, 0], sizes = [1, 16, 32], strides = [1, 1, 1]} : vector<8x16x32xf32> to vector<1x16x32xf32>
    %102 = vector.shape_cast %101 : vector<1x16x32xf32> to vector<16x32xf32>
    %103 = vector.extract_strided_slice %89 {offsets = [0, 2], sizes = [16, 1], strides = [1, 1]} : vector<16x8xf32> to vector<16x1xf32>
    %104 = vector.broadcast %103 : vector<16x1xf32> to vector<16x32xf32>
    %105 = arith.addf %102, %104 : vector<16x32xf32>
    %106 = arith.maximumf %100, %105 : vector<16x32xf32>
    %107 = vector.extract_strided_slice %82 {offsets = [3, 0, 0], sizes = [1, 16, 32], strides = [1, 1, 1]} : vector<8x16x32xf32> to vector<1x16x32xf32>
    %108 = vector.shape_cast %107 : vector<1x16x32xf32> to vector<16x32xf32>
    %109 = vector.extract_strided_slice %89 {offsets = [0, 3], sizes = [16, 1], strides = [1, 1]} : vector<16x8xf32> to vector<16x1xf32>
    %110 = vector.broadcast %109 : vector<16x1xf32> to vector<16x32xf32>
    %111 = arith.addf %108, %110 : vector<16x32xf32>
    %112 = arith.maximumf %106, %111 : vector<16x32xf32>
    %113 = vector.extract_strided_slice %82 {offsets = [4, 0, 0], sizes = [1, 16, 32], strides = [1, 1, 1]} : vector<8x16x32xf32> to vector<1x16x32xf32>
    %114 = vector.shape_cast %113 : vector<1x16x32xf32> to vector<16x32xf32>
    %115 = vector.extract_strided_slice %89 {offsets = [0, 4], sizes = [16, 1], strides = [1, 1]} : vector<16x8xf32> to vector<16x1xf32>
    %116 = vector.broadcast %115 : vector<16x1xf32> to vector<16x32xf32>
    %117 = arith.addf %114, %116 : vector<16x32xf32>
    %118 = arith.maximumf %112, %117 : vector<16x32xf32>
    %119 = vector.extract_strided_slice %82 {offsets = [5, 0, 0], sizes = [1, 16, 32], strides = [1, 1, 1]} : vector<8x16x32xf32> to vector<1x16x32xf32>
    %120 = vector.shape_cast %119 : vector<1x16x32xf32> to vector<16x32xf32>
    %121 = vector.extract_strided_slice %89 {offsets = [0, 5], sizes = [16, 1], strides = [1, 1]} : vector<16x8xf32> to vector<16x1xf32>
    %122 = vector.broadcast %121 : vector<16x1xf32> to vector<16x32xf32>
    %123 = arith.addf %120, %122 : vector<16x32xf32>
    %124 = arith.maximumf %118, %123 : vector<16x32xf32>
    %125 = vector.extract_strided_slice %82 {offsets = [6, 0, 0], sizes = [1, 16, 32], strides = [1, 1, 1]} : vector<8x16x32xf32> to vector<1x16x32xf32>
    %126 = vector.shape_cast %125 : vector<1x16x32xf32> to vector<16x32xf32>
    %127 = vector.extract_strided_slice %89 {offsets = [0, 6], sizes = [16, 1], strides = [1, 1]} : vector<16x8xf32> to vector<16x1xf32>
    %128 = vector.broadcast %127 : vector<16x1xf32> to vector<16x32xf32>
    %129 = arith.addf %126, %128 : vector<16x32xf32>
    %130 = arith.maximumf %124, %129 : vector<16x32xf32>
    %131 = vector.extract_strided_slice %82 {offsets = [7, 0, 0], sizes = [1, 16, 32], strides = [1, 1, 1]} : vector<8x16x32xf32> to vector<1x16x32xf32>
    %132 = vector.shape_cast %131 : vector<1x16x32xf32> to vector<16x32xf32>
    %133 = vector.extract_strided_slice %89 {offsets = [0, 7], sizes = [16, 1], strides = [1, 1]} : vector<16x8xf32> to vector<16x1xf32>
    %134 = vector.broadcast %133 : vector<16x1xf32> to vector<16x32xf32>
    %135 = arith.addf %132, %134 : vector<16x32xf32>
    %136 = arith.maximumf %130, %135 : vector<16x32xf32>
    %137 = vector.broadcast %9 : vector<1x32xf32> to vector<16x32xf32>
    %138 = arith.addf %136, %137 : vector<16x32xf32>
    %c1_36 = arith.constant 1 : index
    %c0_37 = arith.constant 0 : index
    %c0_38 = arith.constant 0 : index
    %139 = vector.load %arg11[%c1_36, %c0_37, %c0_38] : memref<4x16x32xf32, #tpu.memory_space<vmem>>, vector<1x16x32xf32>
    %140 = vector.shape_cast %139 : vector<1x16x32xf32> to vector<16x32xf32>
    %141 = vector.shape_cast %138 : vector<16x32xf32> to vector<1x16x32xf32>
    tpu.vector_store %arg11[%c1_36, %c0_37, %c0_38], %141 {strides = array<i32>} : memref<4x16x32xf32, #tpu.memory_space<vmem>>, vector<1x16x32xf32>,
    %142 = arith.mulf %138, %1 : vector<16x32xf32>
    %cst_39 = arith.constant dense<0.000000e+00> : vector<16xf32>
    %143 = vector.multi_reduction <add>, %142, %cst_39 [1] : vector<16x32xf32> to vector<16xf32>
    %144 = vector.shape_cast %143 : vector<16xf32> to vector<16x1xf32>
    %c0_40 = arith.constant 0 : index
    %c1_41 = arith.constant 1 : index
    %145 = vector.load %arg12[%c0_40, %c1_41] : memref<16x4xf32, #tpu.memory_space<vmem>>, vector<16x1xf32>
    tpu.vector_store %arg12[%c0_40, %c1_41], %144 {strides = array<i32>} : memref<16x4xf32, #tpu.memory_space<vmem>>, vector<16x1xf32>,
    %c2 = arith.constant 2 : index
    %c0_42 = arith.constant 0 : index
    %c0_43 = arith.constant 0 : index
    %c0_44 = arith.constant 0 : index
    %146 = vector.load %arg3[%c2, %c0_42, %c0_43, %c0_44] : memref<4x8x16x48xbf16, #tpu.memory_space<vmem>>, vector<1x8x16x48xbf16>
    %147 = vector.shape_cast %146 : vector<1x8x16x48xbf16> to vector<8x16x48xbf16>
    %148 = vector.shape_cast %147 : vector<8x16x48xbf16> to vector<128x48xbf16>
    %cst_45 = arith.constant dense<0.000000e+00> : vector<128x32xf32>
    %149 = tpu.matmul %148, %8, %cst_45 {dimension_numbers = #tpu.dot_dimension_numbers<[1], [0], [0], [1], [0, 0, 1, 1], [], []>} : vector<128x48xbf16>, vector<48x32xbf16>, vector<128x32xf32> -> vector<128x32xf32>
    %150 = vector.shape_cast %149 : vector<128x32xf32> to vector<8x16x32xf32>
    %c2_46 = arith.constant 2 : index
    %c0_47 = arith.constant 0 : index
    %c0_48 = arith.constant 0 : index
    %151 = vector.load %arg4[%c2_46, %c0_47, %c0_48] : memref<4x16x8xbf16, #tpu.memory_space<vmem>>, vector<1x16x8xbf16>
    %152 = vector.shape_cast %151 : vector<1x16x8xbf16> to vector<16x8xbf16>
    %153 = arith.extf %152 : vector<16x8xbf16> to vector<16x8xf32>
    %cst_49 = arith.constant 1.000000e+00 : f32
    %154 = vector.broadcast %cst_49 : f32 to vector<16x8xf32>
    %155 = arith.subf %153, %154 : vector<16x8xf32>
    %cst_50 = arith.constant 1.000000e+09 : f32
    %156 = vector.broadcast %cst_50 : f32 to vector<16x8xf32>
    %157 = arith.mulf %155, %156 : vector<16x8xf32>
    %158 = vector.extract_strided_slice %150 {offsets = [0, 0, 0], sizes = [1, 16, 32], strides = [1, 1, 1]} : vector<8x16x32xf32> to vector<1x16x32xf32>
    %159 = vector.shape_cast %158 : vector<1x16x32xf32> to vector<16x32xf32>
    %160 = vector.extract_strided_slice %157 {offsets = [0, 0], sizes = [16, 1], strides = [1, 1]} : vector<16x8xf32> to vector<16x1xf32>
    %161 = vector.broadcast %160 : vector<16x1xf32> to vector<16x32xf32>
    %162 = arith.addf %159, %161 : vector<16x32xf32>
    %163 = vector.extract_strided_slice %150 {offsets = [1, 0, 0], sizes = [1, 16, 32], strides = [1, 1, 1]} : vector<8x16x32xf32> to vector<1x16x32xf32>
    %164 = vector.shape_cast %163 : vector<1x16x32xf32> to vector<16x32xf32>
    %165 = vector.extract_strided_slice %157 {offsets = [0, 1], sizes = [16, 1], strides = [1, 1]} : vector<16x8xf32> to vector<16x1xf32>
    %166 = vector.broadcast %165 : vector<16x1xf32> to vector<16x32xf32>
    %167 = arith.addf %164, %166 : vector<16x32xf32>
    %168 = arith.maximumf %162, %167 : vector<16x32xf32>
    %169 = vector.extract_strided_slice %150 {offsets = [2, 0, 0], sizes = [1, 16, 32], strides = [1, 1, 1]} : vector<8x16x32xf32> to vector<1x16x32xf32>
    %170 = vector.shape_cast %169 : vector<1x16x32xf32> to vector<16x32xf32>
    %171 = vector.extract_strided_slice %157 {offsets = [0, 2], sizes = [16, 1], strides = [1, 1]} : vector<16x8xf32> to vector<16x1xf32>
    %172 = vector.broadcast %171 : vector<16x1xf32> to vector<16x32xf32>
    %173 = arith.addf %170, %172 : vector<16x32xf32>
    %174 = arith.maximumf %168, %173 : vector<16x32xf32>
    %175 = vector.extract_strided_slice %150 {offsets = [3, 0, 0], sizes = [1, 16, 32], strides = [1, 1, 1]} : vector<8x16x32xf32> to vector<1x16x32xf32>
    %176 = vector.shape_cast %175 : vector<1x16x32xf32> to vector<16x32xf32>
    %177 = vector.extract_strided_slice %157 {offsets = [0, 3], sizes = [16, 1], strides = [1, 1]} : vector<16x8xf32> to vector<16x1xf32>
    %178 = vector.broadcast %177 : vector<16x1xf32> to vector<16x32xf32>
    %179 = arith.addf %176, %178 : vector<16x32xf32>
    %180 = arith.maximumf %174, %179 : vector<16x32xf32>
    %181 = vector.extract_strided_slice %150 {offsets = [4, 0, 0], sizes = [1, 16, 32], strides = [1, 1, 1]} : vector<8x16x32xf32> to vector<1x16x32xf32>
    %182 = vector.shape_cast %181 : vector<1x16x32xf32> to vector<16x32xf32>
    %183 = vector.extract_strided_slice %157 {offsets = [0, 4], sizes = [16, 1], strides = [1, 1]} : vector<16x8xf32> to vector<16x1xf32>
    %184 = vector.broadcast %183 : vector<16x1xf32> to vector<16x32xf32>
    %185 = arith.addf %182, %184 : vector<16x32xf32>
    %186 = arith.maximumf %180, %185 : vector<16x32xf32>
    %187 = vector.extract_strided_slice %150 {offsets = [5, 0, 0], sizes = [1, 16, 32], strides = [1, 1, 1]} : vector<8x16x32xf32> to vector<1x16x32xf32>
    %188 = vector.shape_cast %187 : vector<1x16x32xf32> to vector<16x32xf32>
    %189 = vector.extract_strided_slice %157 {offsets = [0, 5], sizes = [16, 1], strides = [1, 1]} : vector<16x8xf32> to vector<16x1xf32>
    %190 = vector.broadcast %189 : vector<16x1xf32> to vector<16x32xf32>
    %191 = arith.addf %188, %190 : vector<16x32xf32>
    %192 = arith.maximumf %186, %191 : vector<16x32xf32>
    %193 = vector.extract_strided_slice %150 {offsets = [6, 0, 0], sizes = [1, 16, 32], strides = [1, 1, 1]} : vector<8x16x32xf32> to vector<1x16x32xf32>
    %194 = vector.shape_cast %193 : vector<1x16x32xf32> to vector<16x32xf32>
    %195 = vector.extract_strided_slice %157 {offsets = [0, 6], sizes = [16, 1], strides = [1, 1]} : vector<16x8xf32> to vector<16x1xf32>
    %196 = vector.broadcast %195 : vector<16x1xf32> to vector<16x32xf32>
    %197 = arith.addf %194, %196 : vector<16x32xf32>
    %198 = arith.maximumf %192, %197 : vector<16x32xf32>
    %199 = vector.extract_strided_slice %150 {offsets = [7, 0, 0], sizes = [1, 16, 32], strides = [1, 1, 1]} : vector<8x16x32xf32> to vector<1x16x32xf32>
    %200 = vector.shape_cast %199 : vector<1x16x32xf32> to vector<16x32xf32>
    %201 = vector.extract_strided_slice %157 {offsets = [0, 7], sizes = [16, 1], strides = [1, 1]} : vector<16x8xf32> to vector<16x1xf32>
    %202 = vector.broadcast %201 : vector<16x1xf32> to vector<16x32xf32>
    %203 = arith.addf %200, %202 : vector<16x32xf32>
    %204 = arith.maximumf %198, %203 : vector<16x32xf32>
    %205 = vector.broadcast %9 : vector<1x32xf32> to vector<16x32xf32>
    %206 = arith.addf %204, %205 : vector<16x32xf32>
    %c2_51 = arith.constant 2 : index
    %c0_52 = arith.constant 0 : index
    %c0_53 = arith.constant 0 : index
    %207 = vector.load %arg11[%c2_51, %c0_52, %c0_53] : memref<4x16x32xf32, #tpu.memory_space<vmem>>, vector<1x16x32xf32>
    %208 = vector.shape_cast %207 : vector<1x16x32xf32> to vector<16x32xf32>
    %209 = vector.shape_cast %206 : vector<16x32xf32> to vector<1x16x32xf32>
    tpu.vector_store %arg11[%c2_51, %c0_52, %c0_53], %209 {strides = array<i32>} : memref<4x16x32xf32, #tpu.memory_space<vmem>>, vector<1x16x32xf32>,
    %210 = arith.mulf %206, %1 : vector<16x32xf32>
    %cst_54 = arith.constant dense<0.000000e+00> : vector<16xf32>
    %211 = vector.multi_reduction <add>, %210, %cst_54 [1] : vector<16x32xf32> to vector<16xf32>
    %212 = vector.shape_cast %211 : vector<16xf32> to vector<16x1xf32>
    %c0_55 = arith.constant 0 : index
    %c2_56 = arith.constant 2 : index
    %213 = vector.load %arg12[%c0_55, %c2_56] : memref<16x4xf32, #tpu.memory_space<vmem>>, vector<16x1xf32>
    tpu.vector_store %arg12[%c0_55, %c2_56], %212 {strides = array<i32>} : memref<16x4xf32, #tpu.memory_space<vmem>>, vector<16x1xf32>,
    %c3 = arith.constant 3 : index
    %c0_57 = arith.constant 0 : index
    %c0_58 = arith.constant 0 : index
    %c0_59 = arith.constant 0 : index
    %214 = vector.load %arg3[%c3, %c0_57, %c0_58, %c0_59] : memref<4x8x16x48xbf16, #tpu.memory_space<vmem>>, vector<1x8x16x48xbf16>
    %215 = vector.shape_cast %214 : vector<1x8x16x48xbf16> to vector<8x16x48xbf16>
    %216 = vector.shape_cast %215 : vector<8x16x48xbf16> to vector<128x48xbf16>
    %cst_60 = arith.constant dense<0.000000e+00> : vector<128x32xf32>
    %217 = tpu.matmul %216, %8, %cst_60 {dimension_numbers = #tpu.dot_dimension_numbers<[1], [0], [0], [1], [0, 0, 1, 1], [], []>} : vector<128x48xbf16>, vector<48x32xbf16>, vector<128x32xf32> -> vector<128x32xf32>
    %218 = vector.shape_cast %217 : vector<128x32xf32> to vector<8x16x32xf32>
    %c3_61 = arith.constant 3 : index
    %c0_62 = arith.constant 0 : index
    %c0_63 = arith.constant 0 : index
    %219 = vector.load %arg4[%c3_61, %c0_62, %c0_63] : memref<4x16x8xbf16, #tpu.memory_space<vmem>>, vector<1x16x8xbf16>
    %220 = vector.shape_cast %219 : vector<1x16x8xbf16> to vector<16x8xbf16>
    %221 = arith.extf %220 : vector<16x8xbf16> to vector<16x8xf32>
    %cst_64 = arith.constant 1.000000e+00 : f32
    %222 = vector.broadcast %cst_64 : f32 to vector<16x8xf32>
    %223 = arith.subf %221, %222 : vector<16x8xf32>
    %cst_65 = arith.constant 1.000000e+09 : f32
    %224 = vector.broadcast %cst_65 : f32 to vector<16x8xf32>
    %225 = arith.mulf %223, %224 : vector<16x8xf32>
    %226 = vector.extract_strided_slice %218 {offsets = [0, 0, 0], sizes = [1, 16, 32], strides = [1, 1, 1]} : vector<8x16x32xf32> to vector<1x16x32xf32>
    %227 = vector.shape_cast %226 : vector<1x16x32xf32> to vector<16x32xf32>
    %228 = vector.extract_strided_slice %225 {offsets = [0, 0], sizes = [16, 1], strides = [1, 1]} : vector<16x8xf32> to vector<16x1xf32>
    %229 = vector.broadcast %228 : vector<16x1xf32> to vector<16x32xf32>
    %230 = arith.addf %227, %229 : vector<16x32xf32>
    %231 = vector.extract_strided_slice %218 {offsets = [1, 0, 0], sizes = [1, 16, 32], strides = [1, 1, 1]} : vector<8x16x32xf32> to vector<1x16x32xf32>
    %232 = vector.shape_cast %231 : vector<1x16x32xf32> to vector<16x32xf32>
    %233 = vector.extract_strided_slice %225 {offsets = [0, 1], sizes = [16, 1], strides = [1, 1]} : vector<16x8xf32> to vector<16x1xf32>
    %234 = vector.broadcast %233 : vector<16x1xf32> to vector<16x32xf32>
    %235 = arith.addf %232, %234 : vector<16x32xf32>
    %236 = arith.maximumf %230, %235 : vector<16x32xf32>
    %237 = vector.extract_strided_slice %218 {offsets = [2, 0, 0], sizes = [1, 16, 32], strides = [1, 1, 1]} : vector<8x16x32xf32> to vector<1x16x32xf32>
    %238 = vector.shape_cast %237 : vector<1x16x32xf32> to vector<16x32xf32>
    %239 = vector.extract_strided_slice %225 {offsets = [0, 2], sizes = [16, 1], strides = [1, 1]} : vector<16x8xf32> to vector<16x1xf32>
    %240 = vector.broadcast %239 : vector<16x1xf32> to vector<16x32xf32>
    %241 = arith.addf %238, %240 : vector<16x32xf32>
    %242 = arith.maximumf %236, %241 : vector<16x32xf32>
    %243 = vector.extract_strided_slice %218 {offsets = [3, 0, 0], sizes = [1, 16, 32], strides = [1, 1, 1]} : vector<8x16x32xf32> to vector<1x16x32xf32>
    %244 = vector.shape_cast %243 : vector<1x16x32xf32> to vector<16x32xf32>
    %245 = vector.extract_strided_slice %225 {offsets = [0, 3], sizes = [16, 1], strides = [1, 1]} : vector<16x8xf32> to vector<16x1xf32>
    %246 = vector.broadcast %245 : vector<16x1xf32> to vector<16x32xf32>
    %247 = arith.addf %244, %246 : vector<16x32xf32>
    %248 = arith.maximumf %242, %247 : vector<16x32xf32>
    %249 = vector.extract_strided_slice %218 {offsets = [4, 0, 0], sizes = [1, 16, 32], strides = [1, 1, 1]} : vector<8x16x32xf32> to vector<1x16x32xf32>
    %250 = vector.shape_cast %249 : vector<1x16x32xf32> to vector<16x32xf32>
    %251 = vector.extract_strided_slice %225 {offsets = [0, 4], sizes = [16, 1], strides = [1, 1]} : vector<16x8xf32> to vector<16x1xf32>
    %252 = vector.broadcast %251 : vector<16x1xf32> to vector<16x32xf32>
    %253 = arith.addf %250, %252 : vector<16x32xf32>
    %254 = arith.maximumf %248, %253 : vector<16x32xf32>
    %255 = vector.extract_strided_slice %218 {offsets = [5, 0, 0], sizes = [1, 16, 32], strides = [1, 1, 1]} : vector<8x16x32xf32> to vector<1x16x32xf32>
    %256 = vector.shape_cast %255 : vector<1x16x32xf32> to vector<16x32xf32>
    %257 = vector.extract_strided_slice %225 {offsets = [0, 5], sizes = [16, 1], strides = [1, 1]} : vector<16x8xf32> to vector<16x1xf32>
    %258 = vector.broadcast %257 : vector<16x1xf32> to vector<16x32xf32>
    %259 = arith.addf %256, %258 : vector<16x32xf32>
    %260 = arith.maximumf %254, %259 : vector<16x32xf32>
    %261 = vector.extract_strided_slice %218 {offsets = [6, 0, 0], sizes = [1, 16, 32], strides = [1, 1, 1]} : vector<8x16x32xf32> to vector<1x16x32xf32>
    %262 = vector.shape_cast %261 : vector<1x16x32xf32> to vector<16x32xf32>
    %263 = vector.extract_strided_slice %225 {offsets = [0, 6], sizes = [16, 1], strides = [1, 1]} : vector<16x8xf32> to vector<16x1xf32>
    %264 = vector.broadcast %263 : vector<16x1xf32> to vector<16x32xf32>
    %265 = arith.addf %262, %264 : vector<16x32xf32>
    %266 = arith.maximumf %260, %265 : vector<16x32xf32>
    %267 = vector.extract_strided_slice %218 {offsets = [7, 0, 0], sizes = [1, 16, 32], strides = [1, 1, 1]} : vector<8x16x32xf32> to vector<1x16x32xf32>
    %268 = vector.shape_cast %267 : vector<1x16x32xf32> to vector<16x32xf32>
    %269 = vector.extract_strided_slice %225 {offsets = [0, 7], sizes = [16, 1], strides = [1, 1]} : vector<16x8xf32> to vector<16x1xf32>
    %270 = vector.broadcast %269 : vector<16x1xf32> to vector<16x32xf32>
    %271 = arith.addf %268, %270 : vector<16x32xf32>
    %272 = arith.maximumf %266, %271 : vector<16x32xf32>
    %273 = vector.broadcast %9 : vector<1x32xf32> to vector<16x32xf32>
    %274 = arith.addf %272, %273 : vector<16x32xf32>
    %c3_66 = arith.constant 3 : index
    %c0_67 = arith.constant 0 : index
    %c0_68 = arith.constant 0 : index
    %275 = vector.load %arg11[%c3_66, %c0_67, %c0_68] : memref<4x16x32xf32, #tpu.memory_space<vmem>>, vector<1x16x32xf32>
    %276 = vector.shape_cast %275 : vector<1x16x32xf32> to vector<16x32xf32>
    %277 = vector.shape_cast %274 : vector<16x32xf32> to vector<1x16x32xf32>
    tpu.vector_store %arg11[%c3_66, %c0_67, %c0_68], %277 {strides = array<i32>} : memref<4x16x32xf32, #tpu.memory_space<vmem>>, vector<1x16x32xf32>,
    %278 = arith.mulf %274, %1 : vector<16x32xf32>
    %cst_69 = arith.constant dense<0.000000e+00> : vector<16xf32>
    %279 = vector.multi_reduction <add>, %278, %cst_69 [1] : vector<16x32xf32> to vector<16xf32>
    %280 = vector.shape_cast %279 : vector<16xf32> to vector<16x1xf32>
    %c0_70 = arith.constant 0 : index
    %c3_71 = arith.constant 3 : index
    %281 = vector.load %arg12[%c0_70, %c3_71] : memref<16x4xf32, #tpu.memory_space<vmem>>, vector<16x1xf32>
    tpu.vector_store %arg12[%c0_70, %c3_71], %280 {strides = array<i32>} : memref<16x4xf32, #tpu.memory_space<vmem>>, vector<16x1xf32>,
    %c0_72 = arith.constant 0 : index
    %c0_73 = arith.constant 0 : index
    %282 = vector.load %arg5[%c0_72, %c0_73] : memref<16x4xf32, #tpu.memory_space<vmem>>, vector<16x4xf32>
    %cst_74 = arith.constant 0.000000e+00 : f32
    %283 = vector.broadcast %cst_74 : f32 to vector<16x4xf32>
    %284 = arith.cmpf ogt, %282, %283 : vector<16x4xf32>
    %c0_75 = arith.constant 0 : index
    %c0_76 = arith.constant 0 : index
    %285 = vector.load %arg12[%c0_75, %c0_76] : memref<16x4xf32, #tpu.memory_space<vmem>>, vector<16x4xf32>
    %cst_77 = arith.constant -1.000000e+09 : f32
    %286 = vector.broadcast %cst_77 : f32 to vector<16x4xf32>
    %287 = arith.select %284, %285, %286 : vector<16x4xi1>, vector<16x4xf32>
    %cst_78 = arith.constant dense<0xFF800000> : vector<16xf32>
    %288 = vector.multi_reduction <maximumf>, %287, %cst_78 [1] : vector<16x4xf32> to vector<16xf32>
    %289 = vector.shape_cast %288 : vector<16xf32> to vector<16x1xf32>
    %290 = vector.broadcast %289 : vector<16x1xf32> to vector<16x4xf32>
    %291 = arith.subf %287, %290 : vector<16x4xf32>
    %292 = math.exp %291 : vector<16x4xf32>
    %cst_79 = arith.constant dense<0.000000e+00> : vector<16xf32>
    %293 = vector.multi_reduction <add>, %292, %cst_79 [1] : vector<16x4xf32> to vector<16xf32>
    %294 = vector.shape_cast %293 : vector<16xf32> to vector<16x1xf32>
    %295 = tpu.reciprocal %294 : vector<16x1xf32> -> vector<16x1xf32>
    %296 = vector.broadcast %295 : vector<16x1xf32> to vector<16x4xf32>
    %297 = arith.mulf %292, %296 : vector<16x4xf32>
    %cst_80 = arith.constant 0.000000e+00 : f32
    %298 = vector.broadcast %cst_80 : f32 to vector<16x32xf32>
    %299 = vector.extract_strided_slice %297 {offsets = [0, 0], sizes = [16, 1], strides = [1, 1]} : vector<16x4xf32> to vector<16x1xf32>
    %c0_81 = arith.constant 0 : index
    %c0_82 = arith.constant 0 : index
    %c0_83 = arith.constant 0 : index
    %300 = vector.load %arg11[%c0_81, %c0_82, %c0_83] : memref<4x16x32xf32, #tpu.memory_space<vmem>>, vector<1x16x32xf32>
    %301 = vector.shape_cast %300 : vector<1x16x32xf32> to vector<16x32xf32>
    %302 = vector.broadcast %299 : vector<16x1xf32> to vector<16x32xf32>
    %303 = arith.mulf %302, %301 : vector<16x32xf32>
    %304 = arith.addf %298, %303 : vector<16x32xf32>
    %305 = vector.extract_strided_slice %297 {offsets = [0, 1], sizes = [16, 1], strides = [1, 1]} : vector<16x4xf32> to vector<16x1xf32>
    %c1_84 = arith.constant 1 : index
    %c0_85 = arith.constant 0 : index
    %c0_86 = arith.constant 0 : index
    %306 = vector.load %arg11[%c1_84, %c0_85, %c0_86] : memref<4x16x32xf32, #tpu.memory_space<vmem>>, vector<1x16x32xf32>
    %307 = vector.shape_cast %306 : vector<1x16x32xf32> to vector<16x32xf32>
    %308 = vector.broadcast %305 : vector<16x1xf32> to vector<16x32xf32>
    %309 = arith.mulf %308, %307 : vector<16x32xf32>
    %310 = arith.addf %304, %309 : vector<16x32xf32>
    %311 = vector.extract_strided_slice %297 {offsets = [0, 2], sizes = [16, 1], strides = [1, 1]} : vector<16x4xf32> to vector<16x1xf32>
    %c2_87 = arith.constant 2 : index
    %c0_88 = arith.constant 0 : index
    %c0_89 = arith.constant 0 : index
    %312 = vector.load %arg11[%c2_87, %c0_88, %c0_89] : memref<4x16x32xf32, #tpu.memory_space<vmem>>, vector<1x16x32xf32>
    %313 = vector.shape_cast %312 : vector<1x16x32xf32> to vector<16x32xf32>
    %314 = vector.broadcast %311 : vector<16x1xf32> to vector<16x32xf32>
    %315 = arith.mulf %314, %313 : vector<16x32xf32>
    %316 = arith.addf %310, %315 : vector<16x32xf32>
    %317 = vector.extract_strided_slice %297 {offsets = [0, 3], sizes = [16, 1], strides = [1, 1]} : vector<16x4xf32> to vector<16x1xf32>
    %c3_90 = arith.constant 3 : index
    %c0_91 = arith.constant 0 : index
    %c0_92 = arith.constant 0 : index
    %318 = vector.load %arg11[%c3_90, %c0_91, %c0_92] : memref<4x16x32xf32, #tpu.memory_space<vmem>>, vector<1x16x32xf32>
    %319 = vector.shape_cast %318 : vector<1x16x32xf32> to vector<16x32xf32>
    %320 = vector.broadcast %317 : vector<16x1xf32> to vector<16x32xf32>
    %321 = arith.mulf %320, %319 : vector<16x32xf32>
    %322 = arith.addf %316, %321 : vector<16x32xf32>
    %323 = arith.addf %1, %7 : vector<16x32xf32>
    %324 = arith.addf %323, %322 : vector<16x32xf32>
    %c0_93 = arith.constant 0 : index
    %c0_94 = arith.constant 0 : index
    %325 = vector.load %arg10[%c0_93, %c0_94] : memref<16x32xf32, #tpu.memory_space<vmem>>, vector<16x32xf32>
    tpu.vector_store %arg10[%c0_93, %c0_94], %324 {strides = array<i32>} : memref<16x32xf32, #tpu.memory_space<vmem>>, vector<16x32xf32>,
    return
  }
  func.func @transform_0(%arg0: i32) -> (i32, i32) {
    %c0_i32 = arith.constant 0 : i32
    %c0_i32_0 = arith.constant 0 : i32
    return %arg0, %c0_i32 : i32, i32
  }
  func.func @transform_1(%arg0: i32) -> (i32, i32) {
    %c0_i32 = arith.constant 0 : i32
    %c0_i32_0 = arith.constant 0 : i32
    return %arg0, %c0_i32 : i32, i32
  }
  func.func @transform_2(%arg0: i32) -> (i32, i32, i32, i32) {
    %c0_i32 = arith.constant 0 : i32
    %c0_i32_0 = arith.constant 0 : i32
    %c0_i32_1 = arith.constant 0 : i32
    %c0_i32_2 = arith.constant 0 : i32
    return %c0_i32, %c0_i32_0, %arg0, %c0_i32_1 : i32, i32, i32, i32
  }
  func.func @transform_3(%arg0: i32) -> (i32, i32, i32) {
    %c0_i32 = arith.constant 0 : i32
    %c0_i32_0 = arith.constant 0 : i32
    %c0_i32_1 = arith.constant 0 : i32
    return %c0_i32, %arg0, %c0_i32_0 : i32, i32, i32
  }
  func.func @transform_4(%arg0: i32) -> (i32, i32) {
    %c0_i32 = arith.constant 0 : i32
    %c0_i32_0 = arith.constant 0 : i32
    return %arg0, %c0_i32 : i32, i32
  }
  func.func @transform_5(%arg0: i32) -> (i32, i32) {
    %c0_i32 = arith.constant 0 : i32
    %c0_i32_0 = arith.constant 0 : i32
    %c0_i32_1 = arith.constant 0 : i32
    return %c0_i32, %c0_i32_0 : i32, i32
  }
  func.func @transform_6(%arg0: i32) -> (i32, i32) {
    %c0_i32 = arith.constant 0 : i32
    %c0_i32_0 = arith.constant 0 : i32
    %c0_i32_1 = arith.constant 0 : i32
    return %c0_i32, %c0_i32_0 : i32, i32
  }
  func.func @transform_7(%arg0: i32) -> (i32, i32) {
    %c0_i32 = arith.constant 0 : i32
    %c0_i32_0 = arith.constant 0 : i32
    %c0_i32_1 = arith.constant 0 : i32
    return %c0_i32, %c0_i32_0 : i32, i32
  }
  func.func @transform_8(%arg0: i32) -> (i32, i32) {
    %c0_i32 = arith.constant 0 : i32
    %c0_i32_0 = arith.constant 0 : i32
    %c0_i32_1 = arith.constant 0 : i32
    return %c0_i32, %c0_i32_0 : i32, i32
  }
  func.func @transform_9(%arg0: i32) -> (i32, i32) {
    %c0_i32 = arith.constant 0 : i32
    %c0_i32_0 = arith.constant 0 : i32
    return %arg0, %c0_i32 : i32, i32
  }
}

</mosaic_0001>

<llo_original>
// kernel: tpu_custom_call.1
$region0: #{tpu_custom_call.1}
  #allocation0 [shape = 'u32[]', space=smem, size = 0x4, offset = 0x4, fixed_abs, tag = 'smem constant byte address 0x4 - core index']
  #allocation1 [shape = 'u32[144,128]{1,0:T(1,128)}', space=vmem, size = 0x12000, scoped, tag = 'internal scratch']
  #allocation2 [shape = 'f32[4,16,32]{2,1,0:T(8,128)}', space=vmem, size = 0x8000, scoped, tag = 'scratch operand']
  #allocation3 [shape = 'f32[16,4]{1,0:T(8,128)}', space=vmem, size = 0x2000, scoped, tag = 'scratch operand']
  #allocation7 [shape = 's32[]', space=sflag, size = 0x4, offset = 0, fixed_abs, tag = 'sflag constant byte address 0x0 - dummy sync flag']
  %s0 = inlined_call_operand.vmem [shape: bf16[48,32], index: 0, kind: input, shape index: {}]
  %s1 = inlined_call_operand.vmem [shape: bf16[48,16], index: 1, kind: input, shape index: {}]
  %s2 = inlined_call_operand.hbm [shape: bf16[4,8,48,48], index: 2, kind: input, shape index: {}]
  %s3 = inlined_call_operand.vmem [shape: bf16[4,48,8], index: 3, kind: input, shape index: {}]
  %s4 = inlined_call_operand.vmem [shape: f32[48,4], index: 4, kind: input, shape index: {}]
  %s5 = inlined_call_operand.vmem [shape: bf16[16,32], index: 5, kind: input, shape index: {}]
  %s6 = inlined_call_operand.vmem [shape: f32[1,32], index: 6, kind: input, shape index: {}]
  %s7 = inlined_call_operand.vmem [shape: bf16[48,32], index: 7, kind: input, shape index: {}]
  %s8 = inlined_call_operand.vmem [shape: f32[1,32], index: 8, kind: input, shape index: {}]
  %s9 = inlined_call_operand.vmem [shape: f32[48,32], index: 9, kind: output, shape index: {}]
  %s10 = sld [smem:[#allocation0]]
  $region114: #{tpu_custom_call.1} parent=0
    _
  %s12 = ssub.s32 1, %s10
  %s13 = scalar_select 0, %s12, %s10
  $region1: #{tpu_custom_call.1} parent=0
    #allocation4 [shape = 'u8[262144]{0}', space=vmem, size = 0x40000, scoped, tag = 'input window, operand 2']
    #allocation5 [shape = 's32[2]{0}', space=sflag, size = 0x8, scoped, tag = 'scoped memory for tpu_custom_call.1']
    #allocation6 [shape = 'u8[32768]{0}', space=vmem, size = 0x8000, scoped, tag = 'input window, operand 3']
    %14 = vsyncpa [#allocation5], 0
    %s15 = scalar_lea.sflag [#allocation5], 1
    %16 = vsyncpa %s15, 0
    loop: start=0, step=1, limit=5
    $region2: #{tpu_custom_call.1} parent=1 // loop_pre_header
      _
    $region3: #{tpu_custom_call.1} parent=1 // loop_header
      %s18 = sphi 0, %s22
      %p19 = scmp.ge.s32.totalorder %s18, 5
      %s28 = sphi 0, %s30
      %s31 = sphi 0, %s28
      %s32 = sphi 0, %s31
      %s48 = sphi 0, %s32
      %s54 = sphi 0, %s56
      %s57 = sphi 0, %s54
      %s58 = sphi 0, %s57
      %s74 = sphi 0, %s58
      %s80 = sphi 0, %s82
      %s83 = sphi 0, %s80
      %s84 = sphi 0, %s83
      %s100 = sphi 0, %s84
      %s106 = sphi 0, %s108
      %s109 = sphi 0, %s106
      %s110 = sphi 0, %s109
      %s126 = sphi 0, %s110
      %s132 = sphi 0, %s134
      %s135 = sphi 0, %s132
      %s136 = sphi 0, %s135
      %s152 = sphi 0, %s136
      %s156 = sphi 0, %s156
      %s158 = sphi 0, %s156
      %s159 = sphi 0, %s158
      %s173 = sphi 0, %s159
      %s177 = sphi 0, %s177
      %s179 = sphi 0, %s177
      %s180 = sphi 0, %s179
      %s194 = sphi 0, %s180
      %s198 = sphi 0, %s198
      %s200 = sphi 0, %s198
      %s201 = sphi 0, %s200
      %s215 = sphi 0, %s201
      %s219 = sphi 0, %s219
      %s221 = sphi 0, %s219
      %s222 = sphi 0, %s221
      %s236 = sphi 0, %s222
      %s242 = sphi 0, %s244
      %s245 = sphi 0, %s242
      %s246 = sphi 0, %s245
      %s262 = sphi 0, %s246
    $region4: #{tpu_custom_call.1} parent=1 // loop_header_branch
      %21 = sbr.rel (%p19) target = $region8
    $region5: #{tpu_custom_call.1} parent=1 // loop_body
      %s23 = ssub.s32 %s18, 1
      %s24 = ssub.s32 %s18, 2
      %s25 = sadd.s32 %s18, 1
      %s26 = ssub.s32 %s18, %s25
      %p27 = scmp.eq.s32.totalorder %s26, 0
      %s29 = sadd.s32 %s28, 1
      %s30 = scalar_select %p27, %s28, %s29
      %p33 = pneg %p27
      %p34 = scmp.eq.s32.totalorder %s18, 2
      %p35 = por %p33, %p34
      %p36 = scmp.ne.s32.totalorder %s28, %s31
      %p37 = scmp.eq.s32.totalorder %s18, 0
      %p38 = por %p36, %p37
      %p39 = scmp.ne.s32.totalorder %s28, %s31
      %p40 = scmp.eq.s32.totalorder %s23, 2
      %p41 = por %p39, %p40
      %p42 = scmp.ne.s32.totalorder %s31, %s32
      %p43 = scmp.eq.s32.totalorder %s23, 0
      %p44 = por %p42, %p43
      %p45 = scmp.ne.s32.totalorder %s31, %s32
      %p46 = scmp.eq.s32.totalorder %s24, 2
      %p47 = por %p45, %p46
      %p49 = scmp.ne.s32.totalorder %s32, %s48
      %p50 = scmp.eq.s32.totalorder %s24, 0
      %p51 = por %p49, %p50
      %s52 = ssub.s32 %s18, %s25
      %p53 = scmp.eq.s32.totalorder %s52, 0
      %s55 = sadd.s32 %s54, 1
      %s56 = scalar_select %p53, %s54, %s55
      %p59 = pneg %p53
      %p60 = scmp.eq.s32.totalorder %s18, 2
      %p61 = por %p59, %p60
      %p62 = scmp.ne.s32.totalorder %s54, %s57
      %p63 = scmp.eq.s32.totalorder %s18, 0
      %p64 = por %p62, %p63
      %p65 = scmp.ne.s32.totalorder %s54, %s57
      %p66 = scmp.eq.s32.totalorder %s23, 2
      %p67 = por %p65, %p66
      %p68 = scmp.ne.s32.totalorder %s57, %s58
      %p69 = scmp.eq.s32.totalorder %s23, 0
      %p70 = por %p68, %p69
      %p71 = scmp.ne.s32.totalorder %s57, %s58
      %p72 = scmp.eq.s32.totalorder %s24, 2
      %p73 = por %p71, %p72
      %p75 = scmp.ne.s32.totalorder %s58, %s74
      %p76 = scmp.eq.s32.totalorder %s24, 0
      %p77 = por %p75, %p76
      %s78 = ssub.s32 %s18, %s25
      %p79 = scmp.eq.s32.totalorder %s78, 0
      %s81 = sadd.s32 %s80, 1
      %s82 = scalar_select %p79, %s80, %s81
      %p85 = pneg %p79
      %p86 = scmp.eq.s32.totalorder %s18, 2
      %p87 = por %p85, %p86
      %p88 = scmp.ne.s32.totalorder %s80, %s83
      %p89 = scmp.eq.s32.totalorder %s18, 0
      %p90 = por %p88, %p89
      %p91 = scmp.ne.s32.totalorder %s80, %s83
      %p92 = scmp.eq.s32.totalorder %s23, 2
      %p93 = por %p91, %p92
      %p94 = scmp.ne.s32.totalorder %s83, %s84
      %p95 = scmp.eq.s32.totalorder %s23, 0
      %p96 = por %p94, %p95
      %p97 = scmp.ne.s32.totalorder %s83, %s84
      %p98 = scmp.eq.s32.totalorder %s24, 2
      %p99 = por %p97, %p98
      %p101 = scmp.ne.s32.totalorder %s84, %s100
      %p102 = scmp.eq.s32.totalorder %s24, 0
      %p103 = por %p101, %p102
      %s104 = ssub.s32 %s18, %s25
      %p105 = scmp.eq.s32.totalorder %s104, 0
      %s107 = sadd.s32 %s106, 1
      %s108 = scalar_select %p105, %s106, %s107
      %p111 = pneg %p105
      %p112 = scmp.eq.s32.totalorder %s18, 2
      %p113 = por %p111, %p112
      %p114 = scmp.ne.s32.totalorder %s106, %s109
      %p115 = scmp.eq.s32.totalorder %s18, 0
      %p116 = por %p114, %p115
      %p117 = scmp.ne.s32.totalorder %s106, %s109
      %p118 = scmp.eq.s32.totalorder %s23, 2
      %p119 = por %p117, %p118
      %p120 = scmp.ne.s32.totalorder %s109, %s110
      %p121 = scmp.eq.s32.totalorder %s23, 0
      %p122 = por %p120, %p121
      %p123 = scmp.ne.s32.totalorder %s109, %s110
      %p124 = scmp.eq.s32.totalorder %s24, 2
      %p125 = por %p123, %p124
      %p127 = scmp.ne.s32.totalorder %s110, %s126
      %p128 = scmp.eq.s32.totalorder %s24, 0
      %p129 = por %p127, %p128
      %s130 = ssub.s32 %s18, %s25
      %p131 = scmp.eq.s32.totalorder %s130, 0
      %s133 = sadd.s32 %s132, 1
      %s134 = scalar_select %p131, %s132, %s133
      %p137 = pneg %p131
      %p138 = scmp.eq.s32.totalorder %s18, 2
      %p139 = por %p137, %p138
      %p140 = scmp.ne.s32.totalorder %s132, %s135
      %p141 = scmp.eq.s32.totalorder %s18, 0
      %p142 = por %p140, %p141
      %p143 = scmp.ne.s32.totalorder %s132, %s135
      %p144 = scmp.eq.s32.totalorder %s23, 2
      %p145 = por %p143, %p144
      %p146 = scmp.ne.s32.totalorder %s135, %s136
      %p147 = scmp.eq.s32.totalorder %s23, 0
      %p148 = por %p146, %p147
      %p149 = scmp.ne.s32.totalorder %s135, %s136
      %p150 = scmp.eq.s32.totalorder %s24, 2
      %p151 = por %p149, %p150
      %p153 = scmp.ne.s32.totalorder %s136, %s152
      %p154 = scmp.eq.s32.totalorder %s24, 0
      %p155 = por %p153, %p154
      %s157 = sadd.s32 %s156, 1
      %p160 = scmp.eq.s32.totalorder %s18, 2
      %p161 = scmp.ne.s32.totalorder %s156, %s158
      %p162 = scmp.eq.s32.totalorder %s18, 0
      %p163 = por %p161, %p162
      %p164 = scmp.ne.s32.totalorder %s156, %s158
      %p165 = scmp.eq.s32.totalorder %s23, 2
      %p166 = por %p164, %p165
      %p167 = scmp.ne.s32.totalorder %s158, %s159
      %p168 = scmp.eq.s32.totalorder %s23, 0
      %p169 = por %p167, %p168
      %p170 = scmp.ne.s32.totalorder %s158, %s159
      %p171 = scmp.eq.s32.totalorder %s24, 2
      %p172 = por %p170, %p171
      %p174 = scmp.ne.s32.totalorder %s159, %s173
      %p175 = scmp.eq.s32.totalorder %s24, 0
      %p176 = por %p174, %p175
      %s178 = sadd.s32 %s177, 1
      %p181 = scmp.eq.s32.totalorder %s18, 2
      %p182 = scmp.ne.s32.totalorder %s177, %s179
      %p183 = scmp.eq.s32.totalorder %s18, 0
      %p184 = por %p182, %p183
      %p185 = scmp.ne.s32.totalorder %s177, %s179
      %p186 = scmp.eq.s32.totalorder %s23, 2
      %p187 = por %p185, %p186
      %p188 = scmp.ne.s32.totalorder %s179, %s180
      %p189 = scmp.eq.s32.totalorder %s23, 0
      %p190 = por %p188, %p189
      %p191 = scmp.ne.s32.totalorder %s179, %s180
      %p192 = scmp.eq.s32.totalorder %s24, 2
      %p193 = por %p191, %p192
      %p195 = scmp.ne.s32.totalorder %s180, %s194
      %p196 = scmp.eq.s32.totalorder %s24, 0
      %p197 = por %p195, %p196
      %s199 = sadd.s32 %s198, 1
      %p202 = scmp.eq.s32.totalorder %s18, 2
      %p203 = scmp.ne.s32.totalorder %s198, %s200
      %p204 = scmp.eq.s32.totalorder %s18, 0
      %p205 = por %p203, %p204
      %p206 = scmp.ne.s32.totalorder %s198, %s200
      %p207 = scmp.eq.s32.totalorder %s23, 2
      %p208 = por %p206, %p207
      %p209 = scmp.ne.s32.totalorder %s200, %s201
      %p210 = scmp.eq.s32.totalorder %s23, 0
      %p211 = por %p209, %p210
      %p212 = scmp.ne.s32.totalorder %s200, %s201
      %p213 = scmp.eq.s32.totalorder %s24, 2
      %p214 = por %p212, %p213
      %p216 = scmp.ne.s32.totalorder %s201, %s215
      %p217 = scmp.eq.s32.totalorder %s24, 0
      %p218 = por %p216, %p217
      %s220 = sadd.s32 %s219, 1
      %p223 = scmp.eq.s32.totalorder %s18, 2
      %p224 = scmp.ne.s32.totalorder %s219, %s221
      %p225 = scmp.eq.s32.totalorder %s18, 0
      %p226 = por %p224, %p225
      %p227 = scmp.ne.s32.totalorder %s219, %s221
      %p228 = scmp.eq.s32.totalorder %s23, 2
      %p229 = por %p227, %p228
      %p230 = scmp.ne.s32.totalorder %s221, %s222
      %p231 = scmp.eq.s32.totalorder %s23, 0
      %p232 = por %p230, %p231
      %p233 = scmp.ne.s32.totalorder %s221, %s222
      %p234 = scmp.eq.s32.totalorder %s24, 2
      %p235 = por %p233, %p234
      %p237 = scmp.ne.s32.totalorder %s222, %s236
      %p238 = scmp.eq.s32.totalorder %s24, 0
      %p239 = por %p237, %p238
      %s240 = ssub.s32 %s18, %s25
      %p241 = scmp.eq.s32.totalorder %s240, 0
      %s243 = sadd.s32 %s242, 1
      %s244 = scalar_select %p241, %s242, %s243
      %p247 = pneg %p241
      %p248 = scmp.eq.s32.totalorder %s18, 2
      %p249 = por %p247, %p248
      %p250 = scmp.ne.s32.totalorder %s242, %s245
      %p251 = scmp.eq.s32.totalorder %s18, 0
      %p252 = por %p250, %p251
      %p253 = scmp.ne.s32.totalorder %s242, %s245
      %p254 = scmp.eq.s32.totalorder %s23, 2
      %p255 = por %p253, %p254
      %p256 = scmp.ne.s32.totalorder %s245, %s246
      %p257 = scmp.eq.s32.totalorder %s23, 0
      %p258 = por %p256, %p257
      %p259 = scmp.ne.s32.totalorder %s245, %s246
      %p260 = scmp.eq.s32.totalorder %s24, 2
      %p261 = por %p259, %p260
      %p263 = scmp.ne.s32.totalorder %s246, %s262
      %p264 = scmp.eq.s32.totalorder %s24, 0
      %p265 = por %p263, %p264
      %p266 = scmp.le.s32.totalorder 1, %s18
      %p267 = scmp.lt.s32.totalorder %s18, 4
      %p268 = pnand %p266, %p267
      %p269 = pneg %p268
      // Predicated region
      $region9: #{tpu_custom_call.1} parent=5 // pred_check
        _
      $region10: #{tpu_custom_call.1} parent=5 // pred_check_branch
        %271 = sbr.rel (%p268) target = $region12
      $region11: #{tpu_custom_call.1} parent=5 // pred_region
        %s272 = ssub.s32 %s18, 1
        // Predicated region
        $region13: #{tpu_custom_call.1} parent=11 // pred_check
          %p273 = pneg %p169
        $region14: #{tpu_custom_call.1} parent=11 // pred_check_branch
          %275 = sbr.rel (%p273) target = $region16
        $region15: #{tpu_custom_call.1} parent=11 // pred_region
          _
        $region16: #{tpu_custom_call.1} parent=11 // pred_fallthru
          _
        // Predicated region
        $region17: #{tpu_custom_call.1} parent=11 // pred_check
          %p276 = pneg %p190
        $region18: #{tpu_custom_call.1} parent=11 // pred_check_branch
          %278 = sbr.rel (%p276) target = $region20
        $region19: #{tpu_custom_call.1} parent=11 // pred_region
          _
        $region20: #{tpu_custom_call.1} parent=11 // pred_fallthru
          _
        // Predicated region
        $region21: #{tpu_custom_call.1} parent=11 // pred_check
          %p279 = pneg %p211
        $region22: #{tpu_custom_call.1} parent=11 // pred_check_branch
          %281 = sbr.rel (%p279) target = $region24
        $region23: #{tpu_custom_call.1} parent=11 // pred_region
          _
        $region24: #{tpu_custom_call.1} parent=11 // pred_fallthru
          _
        // Predicated region
        $region25: #{tpu_custom_call.1} parent=11 // pred_check
          %p282 = pneg %p232
        $region26: #{tpu_custom_call.1} parent=11 // pred_check_branch
          %284 = sbr.rel (%p282) target = $region28
        $region27: #{tpu_custom_call.1} parent=11 // pred_region
          _
        $region28: #{tpu_custom_call.1} parent=11 // pred_fallthru
          _
      $region12: #{tpu_custom_call.1} parent=5 // pred_fallthru
        _
      %p285 = scmp.lt.s32.totalorder %s18, 3
      // Predicated region
      $region29: #{tpu_custom_call.1} parent=5 // pred_check
        %p286 = pneg %p285
      $region30: #{tpu_custom_call.1} parent=5 // pred_check_branch
        %288 = sbr.rel (%p286) target = $region32
      $region31: #{tpu_custom_call.1} parent=5 // pred_region
        // Predicated region
        $region33: #{tpu_custom_call.1} parent=31 // pred_check
          %p289 = pneg %p38
        $region34: #{tpu_custom_call.1} parent=31 // pred_check_branch
          %291 = sbr.rel (%p289) target = $region36
        $region35: #{tpu_custom_call.1} parent=31 // pred_region
          %s292 = smul.u32 2, %s18
          %p293 = scmp.lt.s32.totalorder %s292, 5
          %s294 = scalar_select %p293, %s292, 5
          %s295 = smul.addr %s294, 4
          %s296 = scalar_lea.vmem %s0, %s295
          %s297 = smul.u32 2, %s18
        $region36: #{tpu_custom_call.1} parent=31 // pred_fallthru
          _
        // Predicated region
        $region37: #{tpu_custom_call.1} parent=31 // pred_check
          %p298 = pneg %p64
        $region38: #{tpu_custom_call.1} parent=31 // pred_check_branch
          %300 = sbr.rel (%p298) target = $region40
        $region39: #{tpu_custom_call.1} parent=31 // pred_region
          %s301 = smul.u32 2, %s18
          %p302 = scmp.lt.s32.totalorder %s301, 5
          %s303 = scalar_select %p302, %s301, 5
          %s304 = smul.addr %s303, 4
          %s305 = scalar_lea.vmem %s1, %s304
          %s306 = smul.u32 2, %s18
        $region40: #{tpu_custom_call.1} parent=31 // pred_fallthru
          _
        // Predicated region
        $region41: #{tpu_custom_call.1} parent=31 // pred_check
          %p307 = pneg %p90
        $region42: #{tpu_custom_call.1} parent=31 // pred_check_branch
          %309 = sbr.rel (%p307) target = $region44
        $region43: #{tpu_custom_call.1} parent=31 // pred_region
          #allocation8 [shape = 'u32[6]{0}', space=smem, size = 0x18, scoped, tag = 'DMA stride descriptor']
          %s310 = sand.u32 %s80, 1
          %s311 = scalar_lea.sflag [#allocation5], %s310
          %s312 = sand.u32 %s80, 1
          %s313 = smul.addr %s312, 256
          %s314 = scalar_lea.vmem [#allocation4], %s313
          %s315 = smul.u32 2, %s18
          %s317 = ssub.s32 4096, 4096
          %318 = vsyncadd %s311, %s317
          %s319 = smul.addr %s315, 64
          %s320 = scalar_lea.hbm %s2, %s319
          %s322 = sshll.u32 1, 14
          %s323 = sxor.u32 4294967295, %s322
          %s325 = sld [smem:[#allocation0]]
          %s326 = sadd.s32 2, %s325
          %s328 = sshll.u32 7, 26
          %s329 = sxor.u32 4294967295, %s328
          %s330 = sand.u32 0, %s329
          %s331 = sshll.u32 %s326, 26
          %s332 = sor.u32 %s330, %s331
          %s333 = sshll.u32 %s314, 4
          %s334 = int_to_ptr.vmem [resolvable:$true] %s333
          %340 = sst [smem:[#allocation8]] 384
          %s341 = scalar_lea.smem [#allocation8], 1
          %342 = sst [smem:[%s341]] 128
          %s343 = scalar_lea.smem [#allocation8], 2
          %344 = sst [smem:[%s343]] 2
          %s345 = scalar_lea.smem [#allocation8], 3
          %346 = sst [smem:[%s345]] 64
          %s347 = scalar_lea.smem [#allocation8], 4
          %348 = sst [smem:[%s347]] 64
          %s349 = scalar_lea.smem [#allocation8], 5
          %350 = sst [smem:[%s349]] 4
          %352 = dma.general %s320, 4096, %s334, %s311, [#allocation7], [#allocation8], %s332, 0
        $region44: #{tpu_custom_call.1} parent=31 // pred_fallthru
          _
        // Predicated region
        $region45: #{tpu_custom_call.1} parent=31 // pred_check
          %p353 = pneg %p116
        $region46: #{tpu_custom_call.1} parent=31 // pred_check_branch
          %355 = sbr.rel (%p353) target = $region48
        $region47: #{tpu_custom_call.1} parent=31 // pred_region
          %s356 = sand.u32 %s106, 1
          %s357 = sand.u32 %s106, 1
          %s358 = smul.addr %s357, 32
          %s359 = scalar_lea.vmem [#allocation6], %s358
          %s360 = smul.u32 2, %s18
          %s361 = smul.addr %s360, 4
          %s362 = scalar_lea.vmem %s3, %s361
          // Predicated region
          $region49: #{tpu_custom_call.1} parent=47 // pred_check
            _
          $region50: #{tpu_custom_call.1} parent=47 // pred_check_branch
            %364 = sbr.rel (0) target = $region52
          $region51: #{tpu_custom_call.1} parent=47 // pred_region
            // Predicated region
            $region53: #{tpu_custom_call.1} parent=51 // pred_check
              _
            $region54: #{tpu_custom_call.1} parent=51 // pred_check_branch
              %366 = sbr.rel target = $region56
            $region55: #{tpu_custom_call.1} parent=51 // pred_region
              // Predicated region
              $region68: #{tpu_custom_call.1} parent=55 // pred_check
                _
              $region69: #{tpu_custom_call.1} parent=55 // pred_check_branch
                %395 = sbr.rel (0) target = $region71
              $region70: #{tpu_custom_call.1} parent=55 // pred_region
                loop: start=0, step=1, limit=1
                $region72: #{tpu_custom_call.1} parent=70 // loop_pre_header
                  _
                $region73: #{tpu_custom_call.1} parent=70 // loop_header
                  %s397 = sphi 0, %s401
                  %p398 = scmp.ge.s32.totalorder %s397, 1
                  %s402 = sphi %s362, %s362
                  %s403 = sphi %s359, %s359
                $region74: #{tpu_custom_call.1} parent=70 // loop_header_branch
                  %400 = sbr.rel (%p398) target = $region78
                $region75: #{tpu_custom_call.1} parent=70 // loop_body
                  _
                $region76: #{tpu_custom_call.1} parent=70 // loop_footer
                  %s401 = sadd.s32 1, %s397
                $region77: #{tpu_custom_call.1} parent=70 // loop_footer_branch
                  %396 = sbr.rel target = $region73
                $region78: #{tpu_custom_call.1} parent=70 // loop_exit
                  _
                loop: start=0, step=1, limit=1
                $region79: #{tpu_custom_call.1} parent=70 // loop_pre_header
                  _
                $region80: #{tpu_custom_call.1} parent=70 // loop_header
                  %s406 = sphi 0, %s410
                  %p407 = scmp.ge.s32.totalorder %s406, 1
                  %s411 = sphi %s362, %s362
                  %s412 = sphi %s359, %s359
                $region81: #{tpu_custom_call.1} parent=70 // loop_header_branch
                  %409 = sbr.rel (%p407) target = $region85
                $region82: #{tpu_custom_call.1} parent=70 // loop_body
                  %v413 = vld [vmem:[%s411] sm:$0xf]
                  %414 = vst [vmem:[%s412] sm:$0xf] %v413
                  %v415 = vld [vmem:[%s411 + $0x4] sm:$0xf]
                  %416 = vst [vmem:[%s412 + $0x4] sm:$0xf] %v415
                  %v417 = vld [vmem:[%s411 + $0x18] sm:$0xf]
                  %418 = vst [vmem:[%s412 + $0x8] sm:$0xf] %v417
                  %v419 = vld [vmem:[%s411 + $0x1c] sm:$0xf]
                  %420 = vst [vmem:[%s412 + $0xc] sm:$0xf] %v419
                  %v421 = vld [vmem:[%s411 + $0x30] sm:$0xf]
                  %422 = vst [vmem:[%s412 + $0x10] sm:$0xf] %v421
                  %v423 = vld [vmem:[%s411 + $0x34] sm:$0xf]
                  %424 = vst [vmem:[%s412 + $0x14] sm:$0xf] %v423
                  %v425 = vld [vmem:[%s411 + $0x48] sm:$0xf]
                  %426 = vst [vmem:[%s412 + $0x18] sm:$0xf] %v425
                  %v427 = vld [vmem:[%s411 + $0x4c] sm:$0xf]
                  %428 = vst [vmem:[%s412 + $0x1c] sm:$0xf] %v427
                $region83: #{tpu_custom_call.1} parent=70 // loop_footer
                  %s410 = sadd.s32 1, %s406
                $region84: #{tpu_custom_call.1} parent=70 // loop_footer_branch
                  %405 = sbr.rel target = $region80
                $region85: #{tpu_custom_call.1} parent=70 // loop_exit
                  _
              $region71: #{tpu_custom_call.1} parent=55 // pred_fallthru
                _
            $region56: #{tpu_custom_call.1} parent=51 // pred_fallthru
              _
            // Predicated region
            $region57: #{tpu_custom_call.1} parent=51 // pred_check
              _
            $region58: #{tpu_custom_call.1} parent=51 // pred_check_branch
              %368 = sbr.rel (0) target = $region60
            $region59: #{tpu_custom_call.1} parent=51 // pred_region
              loop: start=0, step=1, limit=1
              $region61: #{tpu_custom_call.1} parent=59 // loop_pre_header
                _
              $region62: #{tpu_custom_call.1} parent=59 // loop_header
                %s371 = sphi 0, %s375
                %p372 = scmp.ge.s32.totalorder %s371, 1
                %s376 = sphi %s362, %s362
                %s377 = sphi %s359, %s359
              $region63: #{tpu_custom_call.1} parent=59 // loop_header_branch
                %374 = sbr.rel (%p372) target = $region67
              $region64: #{tpu_custom_call.1} parent=59 // loop_body
                %v378 = vld [vmem:[%s376] sm:$0xf]
                %379 = vst [vmem:[%s377] sm:$0xf] %v378
                %v380 = vld [vmem:[%s376 + $0x4] sm:$0xf]
                %381 = vst [vmem:[%s377 + $0x4] sm:$0xf] %v380
                %v382 = vld [vmem:[%s376 + $0x18] sm:$0xf]
                %383 = vst [vmem:[%s377 + $0x8] sm:$0xf] %v382
                %v384 = vld [vmem:[%s376 + $0x1c] sm:$0xf]
                %385 = vst [vmem:[%s377 + $0xc] sm:$0xf] %v384
                %v386 = vld [vmem:[%s376 + $0x30] sm:$0xf]
                %387 = vst [vmem:[%s377 + $0x10] sm:$0xf] %v386
                %v388 = vld [vmem:[%s376 + $0x34] sm:$0xf]
                %389 = vst [vmem:[%s377 + $0x14] sm:$0xf] %v388
                %v390 = vld [vmem:[%s376 + $0x48] sm:$0xf]
                %391 = vst [vmem:[%s377 + $0x18] sm:$0xf] %v390
                %v392 = vld [vmem:[%s376 + $0x4c] sm:$0xf]
                %393 = vst [vmem:[%s377 + $0x1c] sm:$0xf] %v392
              $region65: #{tpu_custom_call.1} parent=59 // loop_footer
                %s375 = sadd.s32 1, %s371
              $region66: #{tpu_custom_call.1} parent=59 // loop_footer_branch
                %370 = sbr.rel target = $region62
              $region67: #{tpu_custom_call.1} parent=59 // loop_exit
                _
            $region60: #{tpu_custom_call.1} parent=51 // pred_fallthru
              _
          $region52: #{tpu_custom_call.1} parent=47 // pred_fallthru
            _
          %429 = vnop
        $region48: #{tpu_custom_call.1} parent=31 // pred_fallthru
          _
        // Predicated region
        $region86: #{tpu_custom_call.1} parent=31 // pred_check
          %p430 = pneg %p142
        $region87: #{tpu_custom_call.1} parent=31 // pred_check_branch
          %432 = sbr.rel (%p430) target = $region89
        $region88: #{tpu_custom_call.1} parent=31 // pred_region
          %s433 = smul.u32 2, %s18
          %p434 = scmp.lt.s32.totalorder %s433, 5
          %s435 = scalar_select %p434, %s433, 5
          %s436 = smul.addr %s435, 8
          %s437 = scalar_lea.vmem %s4, %s436
          %s438 = smul.u32 2, %s18
        $region89: #{tpu_custom_call.1} parent=31 // pred_fallthru
          _
      $region32: #{tpu_custom_call.1} parent=5 // pred_fallthru
        _
      %p439 = scmp.le.s32.totalorder 1, %s18
      %p440 = scmp.lt.s32.totalorder %s18, 4
      %p441 = pnand %p439, %p440
      %p442 = pneg %p441
      // Predicated region
      $region90: #{tpu_custom_call.1} parent=5 // pred_check
        _
      $region91: #{tpu_custom_call.1} parent=5 // pred_check_branch
        %444 = sbr.rel (%p441) target = $region93
      $region92: #{tpu_custom_call.1} parent=5 // pred_region
        %s445 = ssub.s32 %s18, 1
        %s446 = sand.u32 %s83, 1
        %s447 = scalar_lea.sflag [#allocation5], %s446
        %s448 = sand.u32 %s83, 1
        %s449 = smul.addr %s448, 256
        %s450 = scalar_lea.vmem [#allocation4], %s449
        // Predicated region
        $region94: #{tpu_custom_call.1} parent=92 // pred_check
          %p451 = pneg %p96
        $region95: #{tpu_custom_call.1} parent=92 // pred_check_branch
          %453 = sbr.rel (%p451) target = $region97
        $region96: #{tpu_custom_call.1} parent=92 // pred_region
          %454 = dma.done %s447, 4096
        $region97: #{tpu_custom_call.1} parent=92 // pred_fallthru
          _
        %s455 = sand.u32 %s109, 1
        %s456 = sand.u32 %s109, 1
        %s457 = smul.addr %s456, 32
        %s458 = scalar_lea.vmem [#allocation6], %s457
        // Predicated region
        $region98: #{tpu_custom_call.1} parent=92 // pred_check
          %p459 = pneg %p122
        $region99: #{tpu_custom_call.1} parent=92 // pred_check_branch
          %461 = sbr.rel (%p459) target = $region101
        $region100: #{tpu_custom_call.1} parent=92 // pred_region
          _
        $region101: #{tpu_custom_call.1} parent=92 // pred_fallthru
          _
        %s462 = smul.u32 2, %s23
        %p463 = scmp.lt.s32.totalorder %s462, 5
        %s464 = scalar_select %p463, %s462, 5
        %s465 = smul.addr %s464, 4
        %s466 = scalar_lea.vmem %s0, %s465
        %p467 = pneg %p44
        %p468 = pneg %p41
        %s469 = smul.u32 2, %s23
        %p470 = scmp.lt.s32.totalorder %s469, 5
        %s471 = scalar_select %p470, %s469, 5
        %s472 = smul.addr %s471, 4
        %s473 = scalar_lea.vmem %s1, %s472
        %p474 = pneg %p70
        %p475 = pneg %p67
        %s476 = sand.u32 %s83, 1
        %s477 = scalar_lea.sflag [#allocation5], %s476
        %s478 = sand.u32 %s83, 1
        %s479 = smul.addr %s478, 256
        %s480 = scalar_lea.vmem [#allocation4], %s479
        %p481 = pneg %p96
        %p482 = pneg %p93
        %s483 = sand.u32 %s109, 1
        %s484 = sand.u32 %s109, 1
        %s485 = smul.addr %s484, 32
        %s486 = scalar_lea.vmem [#allocation6], %s485
        %p487 = pneg %p122
        %p488 = pneg %p119
        %s489 = smul.u32 2, %s23
        %p490 = scmp.lt.s32.totalorder %s489, 5
        %s491 = scalar_select %p490, %s489, 5
        %s492 = smul.addr %s491, 8
        %s493 = scalar_lea.vmem %s4, %s492
        %p494 = pneg %p148
        %p495 = pneg %p145
        %p496 = pneg %p169
        %p497 = pneg %p166
        %p498 = pneg %p190
        %p499 = pneg %p187
        %p500 = pneg %p211
        %p501 = pneg %p208
        %p502 = pneg %p232
        %p503 = pneg %p229
        %p504 = pneg %p258
        %p505 = pneg %p255
        %s506 = smul.u32 2, %s23
        %p507 = scmp.lt.s32.totalorder %s506, 5
        %s508 = scalar_select %p507, %s506, 5
        %s509 = smul.addr %s508, 8
        %s510 = scalar_lea.vmem %s9, %s509
        %s511 = smul.u32 2, %s23
        %p512 = scmp.lt.s32.totalorder %s511, 5
        %s513 = scalar_select %p512, %s511, 5
        %s514 = smul.addr %s513, 4
        %s515 = scalar_lea.vmem %s0, %s514
        %s516 = smul.u32 2, %s23
        %s517 = smul.u32 2, %s23
        %p518 = scmp.lt.s32.totalorder %s517, 5
        %s519 = scalar_select %p518, %s517, 5
        %s520 = smul.addr %s519, 4
        %s521 = scalar_lea.vmem %s1, %s520
        %s522 = smul.u32 2, %s23
        %s523 = smul.u32 2, %s23
        %s524 = smul.u32 2, %s23
        %s525 = smul.u32 2, %s23
        %p526 = scmp.lt.s32.totalorder %s525, 5
        %s527 = scalar_select %p526, %s525, 5
        %s528 = smul.addr %s527, 8
        %s529 = scalar_lea.vmem %s4, %s528
        %s530 = smul.u32 2, %s23
        %s531 = smul.u32 2, %s23
        %p532 = scmp.lt.s32.totalorder %s531, 5
        %s533 = scalar_select %p532, %s531, 5
        %s534 = smul.addr %s533, 8
        %s535 = scalar_lea.vmem %s9, %s534
        %s536 = smul.u32 2, %s23
        %v538 = vld [vmem:[%s515] sm:$0xf]
        %v539 = vld [vmem:[%s515 + $0x4] sm:$0xf]
        %v540 = vunpack.c.l.bf16 %v538
        %v541 = vunpack.c.l.bf16 %v539
        %v542 = vld [vmem:[%s521] sm:$0xf]
        %v543 = vld [vmem:[%s521 + $0x4] sm:$0xf]
        %v544 = vld [vmem:[%s5] sm:$0xf]
        %v545 = vld [vmem:[%s5 + $0x4] sm:$0xf]
        %v546 = vld [vmem:[%s6] sm:$0x1]
        %v548 = vlaneseq
        %v549 = vshrl.u32 %v548, 7
        %v550 = vsub.s32 0, %v549
        %v551 = vrot.slane %v546, %v550
        %v555 = vunpack.c.l.b16 %v542
        %v556 = vunpack.c.l.b16 %v543
        %v557 = vpack.c.b16 %v556, %v555
        %v560 = vunpack.c.l.b16 %v544
        %v561 = vunpack.c.l.b16 %v545
        %v562 = vpack.c.b16 %v561, %v560
        %vm564 = vcmask 130048
        %v566 = vsel %vm564, %v557, 0
        %568 = vmatprep.subr.bf16.mxu0 0
        %569 = vmatpush1.bf16.msra.mxu0 %v562
        %570 = vmatprep.subr.bf16.mxu0 0
        %571 = vmatpush1.bf16.msra.mxu0 0
        %572 = vmatprep.subr.bf16.mxu0 0
        %573 = vmatpush1.bf16.msra.mxu0 0
        %574 = vmatprep.subr.bf16.mxu0 0
        %575 = vmatpush1.bf16.msra.mxu0 0
        %576 = vmatprep.subr.bf16.mxu0 0
        %577 = vmatpush1.bf16.msra.mxu0 0
        %578 = vmatprep.subr.bf16.mxu0 0
        %579 = vmatpush1.bf16.msra.mxu0 0
        %580 = vmatprep.subr.bf16.mxu0 0
        %581 = vmatpush1.bf16.msra.mxu0 0
        %582 = vmatprep.subr.bf16.mxu0 0
        %583 = vmatpush1.bf16.msra.mxu0 0
        %584 = vmatprep.subr.bf16.mxu0 0
        %585 = vmatpush1.bf16.msra.mxu0 0
        %586 = vmatprep.subr.bf16.mxu0 0
        %587 = vmatpush1.bf16.msra.mxu0 0
        %588 = vmatprep.subr.bf16.mxu0 0
        %589 = vmatpush1.bf16.msra.mxu0 0
        %590 = vmatprep.subr.bf16.mxu0 0
        %591 = vmatpush1.bf16.msra.mxu0 0
        %592 = vmatprep.subr.bf16.mxu0 0
        %593 = vmatpush1.bf16.msra.mxu0 0
        %594 = vmatprep.subr.bf16.mxu0 0
        %595 = vmatpush1.bf16.msra.mxu0 0
        %596 = vmatprep.subr.bf16.mxu0 0
        %597 = vmatpush1.bf16.msra.mxu0 0
        %598 = vmatprep.subr.bf16.mxu0 0
        %599 = vmatpush1.bf16.msra.mxu0 0
        %600 = vmatprep.mubr.bf16.mxu0 0
        %601 = vmatmul.mubr.bf16.gmra.mrb[0].mxu0 %v566
        %v602 = vpop.f32.mrb[0].mxu0
        %v603 = vadd.f32 %v551, %v602
        %v604 = vpop.f32.mrb[0].mxu0
        %v605 = vpop.f32.mrb[0].mxu0
        %v606 = vadd.f32 %v551, %v605
        %v607 = vpop.f32.mrb[0].mxu0
        %608 = vdwg.mxu0
        %v609 = vld [vmem:[%s7] sm:$0xf]
        %v610 = vld [vmem:[%s7 + $0x4] sm:$0xf]
        %v611 = vld [vmem:[%s7 + $0x8] sm:$0xf]
        %v612 = vld [vmem:[%s7 + $0xc] sm:$0xf]
        %v613 = vld [vmem:[%s7 + $0x10] sm:$0xf]
        %v614 = vld [vmem:[%s7 + $0x14] sm:$0xf]
        %v615 = vld [vmem:[%s8] sm:$0x1]
        %v616 = vld [vmem:[%s450] sm:$0xf]
        %v617 = vld [vmem:[%s450 + $0x4] sm:$0xf]
        %v618 = vld [vmem:[%s450 + $0x8] sm:$0xf]
        %v619 = vld [vmem:[%s450 + $0xc] sm:$0xf]
        %v620 = vld [vmem:[%s450 + $0x10] sm:$0xf]
        %v621 = vld [vmem:[%s450 + $0x14] sm:$0xf]
        %v622 = vld [vmem:[%s450 + $0x18] sm:$0xf]
        %v623 = vld [vmem:[%s450 + $0x1c] sm:$0xf]
        %v624 = vld [vmem:[%s450 + $0x20] sm:$0xf]
        %v625 = vld [vmem:[%s450 + $0x24] sm:$0xf]
        %v626 = vld [vmem:[%s450 + $0x28] sm:$0xf]
        %v627 = vld [vmem:[%s450 + $0x2c] sm:$0xf]
        %v628 = vld [vmem:[%s450 + $0x30] sm:$0xf]
        %v629 = vld [vmem:[%s450 + $0x34] sm:$0xf]
        %v630 = vld [vmem:[%s450 + $0x38] sm:$0xf]
        %v631 = vld [vmem:[%s450 + $0x3c] sm:$0xf]
        %v648 = vunpack.c.l.b16 %v616
        %v649 = vunpack.c.l.b16 %v617
        %v650 = vunpack.c.l.b16 %v618
        %v651 = vunpack.c.l.b16 %v619
        %v652 = vunpack.c.l.b16 %v620
        %v653 = vunpack.c.l.b16 %v621
        %v654 = vunpack.c.l.b16 %v622
        %v655 = vunpack.c.l.b16 %v623
        %v656 = vunpack.c.l.b16 %v624
        %v657 = vunpack.c.l.b16 %v625
        %v658 = vunpack.c.l.b16 %v626
        %v659 = vunpack.c.l.b16 %v627
        %v660 = vunpack.c.l.b16 %v628
        %v661 = vunpack.c.l.b16 %v629
        %v662 = vunpack.c.l.b16 %v630
        %v663 = vunpack.c.l.b16 %v631
        %v664 = vpack.c.b16 %v649, %v648
        %v665 = vpack.c.b16 %v651, %v650
        %v666 = vpack.c.b16 %v653, %v652
        %v667 = vpack.c.b16 %v655, %v654
        %v668 = vpack.c.b16 %v657, %v656
        %v669 = vpack.c.b16 %v659, %v658
        %v670 = vpack.c.b16 %v661, %v660
        %v671 = vpack.c.b16 %v663, %v662
        %v678 = vunpack.c.l.b16 %v609
        %v679 = vunpack.c.l.b16 %v610
        %v680 = vunpack.c.l.b16 %v611
        %v681 = vunpack.c.l.b16 %v612
        %v682 = vunpack.c.l.b16 %v613
        %v683 = vunpack.c.l.b16 %v614
        %v684 = vpack.c.b16 %v679, %v678
        %v685 = vpack.c.b16 %v681, %v680
        %v686 = vpack.c.b16 %v683, %v682
        %vm690 = vcmask 392192
        %v692 = vsel %vm690, %v664, 0
        %v695 = vsel %vm690, %v665, 0
        %v698 = vsel %vm690, %v666, 0
        %v701 = vsel %vm690, %v667, 0
        %v704 = vsel %vm690, %v668, 0
        %v707 = vsel %vm690, %v669, 0
        %v710 = vsel %vm690, %v670, 0
        %v713 = vsel %vm690, %v671, 0
        %715 = vmatprep.subr.bf16.mxu0 0
        %716 = vmatpush1.bf16.msra.mxu0 %v684
        %717 = vmatprep.subr.bf16.mxu0 0
        %718 = vmatpush1.bf16.msra.mxu0 %v685
        %719 = vmatprep.subr.bf16.mxu0 0
        %720 = vmatpush1.bf16.msra.mxu0 %v686
        %721 = vmatprep.subr.bf16.mxu0 0
        %722 = vmatpush1.bf16.msra.mxu0 0
        %723 = vmatprep.subr.bf16.mxu0 0
        %724 = vmatpush1.bf16.msra.mxu0 0
        %725 = vmatprep.subr.bf16.mxu0 0
        %726 = vmatpush1.bf16.msra.mxu0 0
        %727 = vmatprep.subr.bf16.mxu0 0
        %728 = vmatpush1.bf16.msra.mxu0 0
        %729 = vmatprep.subr.bf16.mxu0 0
        %730 = vmatpush1.bf16.msra.mxu0 0
        %731 = vmatprep.subr.bf16.mxu0 0
        %732 = vmatpush1.bf16.msra.mxu0 0
        %733 = vmatprep.subr.bf16.mxu0 0
        %734 = vmatpush1.bf16.msra.mxu0 0
        %735 = vmatprep.subr.bf16.mxu0 0
        %736 = vmatpush1.bf16.msra.mxu0 0
        %737 = vmatprep.subr.bf16.mxu0 0
        %738 = vmatpush1.bf16.msra.mxu0 0
        %739 = vmatprep.subr.bf16.mxu0 0
        %740 = vmatpush1.bf16.msra.mxu0 0
        %741 = vmatprep.subr.bf16.mxu0 0
        %742 = vmatpush1.bf16.msra.mxu0 0
        %743 = vmatprep.subr.bf16.mxu0 0
        %744 = vmatpush1.bf16.msra.mxu0 0
        %745 = vmatprep.subr.bf16.mxu0 0
        %746 = vmatpush1.bf16.msra.mxu0 0
        %747 = vmatprep.mubr.bf16.mxu0 0
        %748 = vmatmul.mubr.bf16.gmra.mrb[0].mxu0 %v692
        %v749 = vpop.f32.mrb[0].mxu0
        %v750 = vadd.f32 0.0, %v749
        %v751 = vpop.f32.mrb[0].mxu0
        %v752 = vpop.f32.mrb[0].mxu0
        %v753 = vadd.f32 0.0, %v752
        %v754 = vpop.f32.mrb[0].mxu0
        %755 = vmatprep.mubr.bf16.mxu0 0
        %756 = vmatmul.mubr.bf16.gmra.mrb[0].mxu0 %v695
        %v757 = vpop.f32.mrb[0].mxu0
        %v758 = vadd.f32 0.0, %v757
        %v759 = vpop.f32.mrb[0].mxu0
        %v760 = vpop.f32.mrb[0].mxu0
        %v761 = vadd.f32 0.0, %v760
        %v762 = vpop.f32.mrb[0].mxu0
        %763 = vmatprep.mubr.bf16.mxu0 0
        %764 = vmatmul.mubr.bf16.gmra.mrb[0].mxu0 %v698
        %v765 = vpop.f32.mrb[0].mxu0
        %v766 = vadd.f32 0.0, %v765
        %v767 = vpop.f32.mrb[0].mxu0
        %v768 = vpop.f32.mrb[0].mxu0
        %v769 = vadd.f32 0.0, %v768
        %v770 = vpop.f32.mrb[0].mxu0
        %771 = vmatprep.mubr.bf16.mxu0 0
        %772 = vmatmul.mubr.bf16.gmra.mrb[0].mxu0 %v701
        %v773 = vpop.f32.mrb[0].mxu0
        %v774 = vadd.f32 0.0, %v773
        %v775 = vpop.f32.mrb[0].mxu0
        %v776 = vpop.f32.mrb[0].mxu0
        %v777 = vadd.f32 0.0, %v776
        %v778 = vpop.f32.mrb[0].mxu0
        %779 = vmatprep.mubr.bf16.mxu0 0
        %780 = vmatmul.mubr.bf16.gmra.mrb[0].mxu0 %v704
        %v781 = vpop.f32.mrb[0].mxu0
        %v782 = vadd.f32 0.0, %v781
        %v783 = vpop.f32.mrb[0].mxu0
        %v784 = vpop.f32.mrb[0].mxu0
        %v785 = vadd.f32 0.0, %v784
        %v786 = vpop.f32.mrb[0].mxu0
        %787 = vmatprep.mubr.bf16.mxu0 0
        %788 = vmatmul.mubr.bf16.gmra.mrb[0].mxu0 %v707
        %v789 = vpop.f32.mrb[0].mxu0
        %v790 = vadd.f32 0.0, %v789
        %v791 = vpop.f32.mrb[0].mxu0
        %v792 = vpop.f32.mrb[0].mxu0
        %v793 = vadd.f32 0.0, %v792
        %v794 = vpop.f32.mrb[0].mxu0
        %795 = vmatprep.mubr.bf16.mxu0 0
        %796 = vmatmul.mubr.bf16.gmra.mrb[0].mxu0 %v710
        %v797 = vpop.f32.mrb[0].mxu0
        %v798 = vadd.f32 0.0, %v797
        %v799 = vpop.f32.mrb[0].mxu0
        %v800 = vpop.f32.mrb[0].mxu0
        %v801 = vadd.f32 0.0, %v800
        %v802 = vpop.f32.mrb[0].mxu0
        %803 = vmatprep.mubr.bf16.mxu0 0
        %804 = vmatmul.mubr.bf16.gmra.mrb[0].mxu0 %v713
        %v805 = vpop.f32.mrb[0].mxu0
        %v806 = vadd.f32 0.0, %v805
        %v807 = vpop.f32.mrb[0].mxu0
        %v808 = vpop.f32.mrb[0].mxu0
        %v809 = vadd.f32 0.0, %v808
        %v810 = vpop.f32.mrb[0].mxu0
        %811 = vdwg.mxu0
        %v812 = vld [vmem:[%s458] sm:$0xf]
        %v813 = vld [vmem:[%s458 + $0x4] sm:$0xf]
        %v814 = vunpack.c.l.bf16 %v812
        %v815 = vunpack.c.l.bf16 %v813
        %v816 = vsub.f32 %v814, 1.0
        %v817 = vsub.f32 %v815, 1.0
        %v818 = vmul.f32 %v816, 1e+09
        %v819 = vmul.f32 %v817, 1e+09
        %821 = vset.pattern.permute.xlu0 0
        %822 = vperm.xlu0 %821, %v818
        %v823 = vpop.permute.xlu0 %822
        %826 = vset.pattern.permute.xlu0 0
        %827 = vperm.xlu0 %826, %v819
        %v828 = vpop.permute.xlu0 %827
        %v830 = vadd.f32 %v750, %v823
        %v831 = vadd.f32 %v753, %v828
        %832 = vset.pattern.permute.xlu0 1
        %833 = vperm.xlu0 %832, %v818
        %v834 = vpop.permute.xlu0 %833
        %836 = vset.pattern.permute.xlu0 1
        %837 = vperm.xlu0 %836, %v819
        %v838 = vpop.permute.xlu0 %837
        %v840 = vadd.f32 %v758, %v834
        %v841 = vadd.f32 %v761, %v838
        %v842 = vmax.f32 %v830, %v840
        %v843 = vmax.f32 %v831, %v841
        %844 = vset.pattern.permute.xlu0 2
        %845 = vperm.xlu0 %844, %v818
        %v846 = vpop.permute.xlu0 %845
        %848 = vset.pattern.permute.xlu0 2
        %849 = vperm.xlu0 %848, %v819
        %v850 = vpop.permute.xlu0 %849
        %v852 = vadd.f32 %v766, %v846
        %v853 = vadd.f32 %v769, %v850
        %v854 = vmax.f32 %v842, %v852
        %v855 = vmax.f32 %v843, %v853
        %856 = vset.pattern.permute.xlu0 3
        %857 = vperm.xlu0 %856, %v818
        %v858 = vpop.permute.xlu0 %857
        %860 = vset.pattern.permute.xlu0 3
        %861 = vperm.xlu0 %860, %v819
        %v862 = vpop.permute.xlu0 %861
        %v864 = vadd.f32 %v774, %v858
        %v865 = vadd.f32 %v777, %v862
        %v866 = vmax.f32 %v854, %v864
        %v867 = vmax.f32 %v855, %v865
        %868 = vset.pattern.permute.xlu0 4
        %869 = vperm.xlu0 %868, %v818
        %v870 = vpop.permute.xlu0 %869
        %872 = vset.pattern.permute.xlu0 4
        %873 = vperm.xlu0 %872, %v819
        %v874 = vpop.permute.xlu0 %873
        %v876 = vadd.f32 %v782, %v870
        %v877 = vadd.f32 %v785, %v874
        %v878 = vmax.f32 %v866, %v876
        %v879 = vmax.f32 %v867, %v877
        %880 = vset.pattern.permute.xlu0 5
        %881 = vperm.xlu0 %880, %v818
        %v882 = vpop.permute.xlu0 %881
        %884 = vset.pattern.permute.xlu0 5
        %885 = vperm.xlu0 %884, %v819
        %v886 = vpop.permute.xlu0 %885
        %v888 = vadd.f32 %v790, %v882
        %v889 = vadd.f32 %v793, %v886
        %v890 = vmax.f32 %v878, %v888
        %v891 = vmax.f32 %v879, %v889
        %892 = vset.pattern.permute.xlu0 6
        %893 = vperm.xlu0 %892, %v818
        %v894 = vpop.permute.xlu0 %893
        %896 = vset.pattern.permute.xlu0 6
        %897 = vperm.xlu0 %896, %v819
        %v898 = vpop.permute.xlu0 %897
        %v900 = vadd.f32 %v798, %v894
        %v901 = vadd.f32 %v801, %v898
        %v902 = vmax.f32 %v890, %v900
        %v903 = vmax.f32 %v891, %v901
        %904 = vset.pattern.permute.xlu0 7
        %905 = vperm.xlu0 %904, %v818
        %v906 = vpop.permute.xlu0 %905
        %908 = vset.pattern.permute.xlu0 7
        %909 = vperm.xlu0 %908, %v819
        %v910 = vpop.permute.xlu0 %909
        %v912 = vadd.f32 %v806, %v906
        %v913 = vadd.f32 %v809, %v910
        %v914 = vmax.f32 %v902, %v912
        %v915 = vmax.f32 %v903, %v913
        %v917 = vlaneseq
        %v918 = vshrl.u32 %v917, 7
        %v919 = vsub.s32 0, %v918
        %v920 = vrot.slane %v615, %v919
        %v922 = vadd.f32 %v914, %v920
        %v923 = vadd.f32 %v915, %v920
        %vm924 = vcmask 261120
        %925 = vst.msk [vmem:[#allocation2] sm:$0xff] %vm924, %v922
        %926 = vst.msk [vmem:[#allocation2 + $0x8] sm:$0xff] %vm924, %v923
        %v927 = vmul.f32 %v922, %v540
        %v928 = vmul.f32 %v923, %v541
        %v929 = vsel %vm924, %v927, 0.0
        %930 = vadd.xlane.f32.xlu0 %v929
        %v931 = vpop.xlane.xlu0 %930
        %v932 = vsel %vm924, %v928, 0.0
        %933 = vadd.xlane.f32.xlu0 %v932
        %v934 = vpop.xlane.xlu0 %933
        %vm935 = vcmask 7168
        %936 = vst.msk [vmem:[#allocation3] sm:$0xff] %vm935, %v931
        %937 = vst.msk [vmem:[#allocation3 + $0x8] sm:$0xff] %vm935, %v934
        %s938 = scalar_lea.vmem %s450, 64 [#allocation4]
        %v939 = vld [vmem:[%s938] sm:$0xf]
        %v940 = vld [vmem:[%s938 + $0x4] sm:$0xf]
        %v941 = vld [vmem:[%s938 + $0x8] sm:$0xf]
        %v942 = vld [vmem:[%s938 + $0xc] sm:$0xf]
        %v943 = vld [vmem:[%s938 + $0x10] sm:$0xf]
        %v944 = vld [vmem:[%s938 + $0x14] sm:$0xf]
        %v945 = vld [vmem:[%s938 + $0x18] sm:$0xf]
        %v946 = vld [vmem:[%s938 + $0x1c] sm:$0xf]
        %v947 = vld [vmem:[%s938 + $0x20] sm:$0xf]
        %v948 = vld [vmem:[%s938 + $0x24] sm:$0xf]
        %v949 = vld [vmem:[%s938 + $0x28] sm:$0xf]
        %v950 = vld [vmem:[%s938 + $0x2c] sm:$0xf]
        %v951 = vld [vmem:[%s938 + $0x30] sm:$0xf]
        %v952 = vld [vmem:[%s938 + $0x34] sm:$0xf]
        %v953 = vld [vmem:[%s938 + $0x38] sm:$0xf]
        %v954 = vld [vmem:[%s938 + $0x3c] sm:$0xf]
        %v971 = vunpack.c.l.b16 %v939
        %v972 = vunpack.c.l.b16 %v940
        %v973 = vunpack.c.l.b16 %v941
        %v974 = vunpack.c.l.b16 %v942
        %v975 = vunpack.c.l.b16 %v943
        %v976 = vunpack.c.l.b16 %v944
        %v977 = vunpack.c.l.b16 %v945
        %v978 = vunpack.c.l.b16 %v946
        %v979 = vunpack.c.l.b16 %v947
        %v980 = vunpack.c.l.b16 %v948
        %v981 = vunpack.c.l.b16 %v949
        %v982 = vunpack.c.l.b16 %v950
        %v983 = vunpack.c.l.b16 %v951
        %v984 = vunpack.c.l.b16 %v952
        %v985 = vunpack.c.l.b16 %v953
        %v986 = vunpack.c.l.b16 %v954
        %v987 = vpack.c.b16 %v972, %v971
        %v988 = vpack.c.b16 %v974, %v973
        %v989 = vpack.c.b16 %v976, %v975
        %v990 = vpack.c.b16 %v978, %v977
        %v991 = vpack.c.b16 %v980, %v979
        %v992 = vpack.c.b16 %v982, %v981
        %v993 = vpack.c.b16 %v984, %v983
        %v994 = vpack.c.b16 %v986, %v985
        %v996 = vsel %vm690, %v987, 0
        %v999 = vsel %vm690, %v988, 0
        %v1002 = vsel %vm690, %v989, 0
        %v1005 = vsel %vm690, %v990, 0
        %v1008 = vsel %vm690, %v991, 0
        %v1011 = vsel %vm690, %v992, 0
        %v1014 = vsel %vm690, %v993, 0
        %v1017 = vsel %vm690, %v994, 0
        %1019 = vmatprep.subr.bf16.mxu0 0
        %1020 = vmatpush1.bf16.msra.mxu0 %v684
        %1021 = vmatprep.subr.bf16.mxu0 0
        %1022 = vmatpush1.bf16.msra.mxu0 %v685
        %1023 = vmatprep.subr.bf16.mxu0 0
        %1024 = vmatpush1.bf16.msra.mxu0 %v686
        %1025 = vmatprep.subr.bf16.mxu0 0
        %1026 = vmatpush1.bf16.msra.mxu0 0
        %1027 = vmatprep.subr.bf16.mxu0 0
        %1028 = vmatpush1.bf16.msra.mxu0 0
        %1029 = vmatprep.subr.bf16.mxu0 0
        %1030 = vmatpush1.bf16.msra.mxu0 0
        %1031 = vmatprep.subr.bf16.mxu0 0
        %1032 = vmatpush1.bf16.msra.mxu0 0
        %1033 = vmatprep.subr.bf16.mxu0 0
        %1034 = vmatpush1.bf16.msra.mxu0 0
        %1035 = vmatprep.subr.bf16.mxu0 0
        %1036 = vmatpush1.bf16.msra.mxu0 0
        %1037 = vmatprep.subr.bf16.mxu0 0
        %1038 = vmatpush1.bf16.msra.mxu0 0
        %1039 = vmatprep.subr.bf16.mxu0 0
        %1040 = vmatpush1.bf16.msra.mxu0 0
        %1041 = vmatprep.subr.bf16.mxu0 0
        %1042 = vmatpush1.bf16.msra.mxu0 0
        %1043 = vmatprep.subr.bf16.mxu0 0
        %1044 = vmatpush1.bf16.msra.mxu0 0
        %1045 = vmatprep.subr.bf16.mxu0 0
        %1046 = vmatpush1.bf16.msra.mxu0 0
        %1047 = vmatprep.subr.bf16.mxu0 0
        %1048 = vmatpush1.bf16.msra.mxu0 0
        %1049 = vmatprep.subr.bf16.mxu0 0
        %1050 = vmatpush1.bf16.msra.mxu0 0
        %1051 = vmatprep.mubr.bf16.mxu0 0
        %1052 = vmatmul.mubr.bf16.gmra.mrb[0].mxu0 %v996
        %v1053 = vpop.f32.mrb[0].mxu0
        %v1054 = vadd.f32 0.0, %v1053
        %v1055 = vpop.f32.mrb[0].mxu0
        %v1056 = vpop.f32.mrb[0].mxu0
        %v1057 = vadd.f32 0.0, %v1056
        %v1058 = vpop.f32.mrb[0].mxu0
        %1059 = vmatprep.mubr.bf16.mxu0 0
        %1060 = vmatmul.mubr.bf16.gmra.mrb[0].mxu0 %v999
        %v1061 = vpop.f32.mrb[0].mxu0
        %v1062 = vadd.f32 0.0, %v1061
        %v1063 = vpop.f32.mrb[0].mxu0
        %v1064 = vpop.f32.mrb[0].mxu0
        %v1065 = vadd.f32 0.0, %v1064
        %v1066 = vpop.f32.mrb[0].mxu0
        %1067 = vmatprep.mubr.bf16.mxu0 0
        %1068 = vmatmul.mubr.bf16.gmra.mrb[0].mxu0 %v1002
        %v1069 = vpop.f32.mrb[0].mxu0
        %v1070 = vadd.f32 0.0, %v1069
        %v1071 = vpop.f32.mrb[0].mxu0
        %v1072 = vpop.f32.mrb[0].mxu0
        %v1073 = vadd.f32 0.0, %v1072
        %v1074 = vpop.f32.mrb[0].mxu0
        %1075 = vmatprep.mubr.bf16.mxu0 0
        %1076 = vmatmul.mubr.bf16.gmra.mrb[0].mxu0 %v1005
        %v1077 = vpop.f32.mrb[0].mxu0
        %v1078 = vadd.f32 0.0, %v1077
        %v1079 = vpop.f32.mrb[0].mxu0
        %v1080 = vpop.f32.mrb[0].mxu0
        %v1081 = vadd.f32 0.0, %v1080
        %v1082 = vpop.f32.mrb[0].mxu0
        %1083 = vmatprep.mubr.bf16.mxu0 0
        %1084 = vmatmul.mubr.bf16.gmra.mrb[0].mxu0 %v1008
        %v1085 = vpop.f32.mrb[0].mxu0
        %v1086 = vadd.f32 0.0, %v1085
        %v1087 = vpop.f32.mrb[0].mxu0
        %v1088 = vpop.f32.mrb[0].mxu0
        %v1089 = vadd.f32 0.0, %v1088
        %v1090 = vpop.f32.mrb[0].mxu0
        %1091 = vmatprep.mubr.bf16.mxu0 0
        %1092 = vmatmul.mubr.bf16.gmra.mrb[0].mxu0 %v1011
        %v1093 = vpop.f32.mrb[0].mxu0
        %v1094 = vadd.f32 0.0, %v1093
        %v1095 = vpop.f32.mrb[0].mxu0
        %v1096 = vpop.f32.mrb[0].mxu0
        %v1097 = vadd.f32 0.0, %v1096
        %v1098 = vpop.f32.mrb[0].mxu0
        %1099 = vmatprep.mubr.bf16.mxu0 0
        %1100 = vmatmul.mubr.bf16.gmra.mrb[0].mxu0 %v1014
        %v1101 = vpop.f32.mrb[0].mxu0
        %v1102 = vadd.f32 0.0, %v1101
        %v1103 = vpop.f32.mrb[0].mxu0
        %v1104 = vpop.f32.mrb[0].mxu0
        %v1105 = vadd.f32 0.0, %v1104
        %v1106 = vpop.f32.mrb[0].mxu0
        %1107 = vmatprep.mubr.bf16.mxu0 0
        %1108 = vmatmul.mubr.bf16.gmra.mrb[0].mxu0 %v1017
        %v1109 = vpop.f32.mrb[0].mxu0
        %v1110 = vadd.f32 0.0, %v1109
        %v1111 = vpop.f32.mrb[0].mxu0
        %v1112 = vpop.f32.mrb[0].mxu0
        %v1113 = vadd.f32 0.0, %v1112
        %v1114 = vpop.f32.mrb[0].mxu0
        %1115 = vdwg.mxu0
        %s1116 = scalar_lea.vmem %s458, 8 [#allocation6]
        %v1117 = vld [vmem:[%s1116] sm:$0xf]
        %v1118 = vld [vmem:[%s1116 + $0x4] sm:$0xf]
        %v1119 = vunpack.c.l.bf16 %v1117
        %v1120 = vunpack.c.l.bf16 %v1118
        %v1121 = vsub.f32 %v1119, 1.0
        %v1122 = vsub.f32 %v1120, 1.0
        %v1123 = vmul.f32 %v1121, 1e+09
        %v1124 = vmul.f32 %v1122, 1e+09
        %1126 = vset.pattern.permute.xlu0 0
        %1127 = vperm.xlu0 %1126, %v1123
        %v1128 = vpop.permute.xlu0 %1127
        %1131 = vset.pattern.permute.xlu0 0
        %1132 = vperm.xlu0 %1131, %v1124
        %v1133 = vpop.permute.xlu0 %1132
        %v1135 = vadd.f32 %v1054, %v1128
        %v1136 = vadd.f32 %v1057, %v1133
        %1137 = vset.pattern.permute.xlu0 1
        %1138 = vperm.xlu0 %1137, %v1123
        %v1139 = vpop.permute.xlu0 %1138
        %1141 = vset.pattern.permute.xlu0 1
        %1142 = vperm.xlu0 %1141, %v1124
        %v1143 = vpop.permute.xlu0 %1142
        %v1145 = vadd.f32 %v1062, %v1139
        %v1146 = vadd.f32 %v1065, %v1143
        %v1147 = vmax.f32 %v1135, %v1145
        %v1148 = vmax.f32 %v1136, %v1146
        %1149 = vset.pattern.permute.xlu0 2
        %1150 = vperm.xlu0 %1149, %v1123
        %v1151 = vpop.permute.xlu0 %1150
        %1153 = vset.pattern.permute.xlu0 2
        %1154 = vperm.xlu0 %1153, %v1124
        %v1155 = vpop.permute.xlu0 %1154
        %v1157 = vadd.f32 %v1070, %v1151
        %v1158 = vadd.f32 %v1073, %v1155
        %v1159 = vmax.f32 %v1147, %v1157
        %v1160 = vmax.f32 %v1148, %v1158
        %1161 = vset.pattern.permute.xlu0 3
        %1162 = vperm.xlu0 %1161, %v1123
        %v1163 = vpop.permute.xlu0 %1162
        %1165 = vset.pattern.permute.xlu0 3
        %1166 = vperm.xlu0 %1165, %v1124
        %v1167 = vpop.permute.xlu0 %1166
        %v1169 = vadd.f32 %v1078, %v1163
        %v1170 = vadd.f32 %v1081, %v1167
        %v1171 = vmax.f32 %v1159, %v1169
        %v1172 = vmax.f32 %v1160, %v1170
        %1173 = vset.pattern.permute.xlu0 4
        %1174 = vperm.xlu0 %1173, %v1123
        %v1175 = vpop.permute.xlu0 %1174
        %1177 = vset.pattern.permute.xlu0 4
        %1178 = vperm.xlu0 %1177, %v1124
        %v1179 = vpop.permute.xlu0 %1178
        %v1181 = vadd.f32 %v1086, %v1175
        %v1182 = vadd.f32 %v1089, %v1179
        %v1183 = vmax.f32 %v1171, %v1181
        %v1184 = vmax.f32 %v1172, %v1182
        %1185 = vset.pattern.permute.xlu0 5
        %1186 = vperm.xlu0 %1185, %v1123
        %v1187 = vpop.permute.xlu0 %1186
        %1189 = vset.pattern.permute.xlu0 5
        %1190 = vperm.xlu0 %1189, %v1124
        %v1191 = vpop.permute.xlu0 %1190
        %v1193 = vadd.f32 %v1094, %v1187
        %v1194 = vadd.f32 %v1097, %v1191
        %v1195 = vmax.f32 %v1183, %v1193
        %v1196 = vmax.f32 %v1184, %v1194
        %1197 = vset.pattern.permute.xlu0 6
        %1198 = vperm.xlu0 %1197, %v1123
        %v1199 = vpop.permute.xlu0 %1198
        %1201 = vset.pattern.permute.xlu0 6
        %1202 = vperm.xlu0 %1201, %v1124
        %v1203 = vpop.permute.xlu0 %1202
        %v1205 = vadd.f32 %v1102, %v1199
        %v1206 = vadd.f32 %v1105, %v1203
        %v1207 = vmax.f32 %v1195, %v1205
        %v1208 = vmax.f32 %v1196, %v1206
        %1209 = vset.pattern.permute.xlu0 7
        %1210 = vperm.xlu0 %1209, %v1123
        %v1211 = vpop.permute.xlu0 %1210
        %1213 = vset.pattern.permute.xlu0 7
        %1214 = vperm.xlu0 %1213, %v1124
        %v1215 = vpop.permute.xlu0 %1214
        %v1217 = vadd.f32 %v1110, %v1211
        %v1218 = vadd.f32 %v1113, %v1215
        %v1219 = vmax.f32 %v1207, %v1217
        %v1220 = vmax.f32 %v1208, %v1218
        %v1221 = vadd.f32 %v1219, %v920
        %v1222 = vadd.f32 %v1220, %v920
        %s1223 = scalar_lea.vmem [#allocation2], 16
        %1224 = vst.msk [vmem:[%s1223] sm:$0xff] %vm924, %v1221
        %1225 = vst.msk [vmem:[%s1223 + $0x8] sm:$0xff] %vm924, %v1222
        %v1226 = vmul.f32 %v1221, %v540
        %v1227 = vmul.f32 %v1222, %v541
        %v1228 = vsel %vm924, %v1226, 0.0
        %1229 = vadd.xlane.f32.xlu0 %v1228
        %v1230 = vpop.xlane.xlu0 %1229
        %v1231 = vsel %vm924, %v1227, 0.0
        %1232 = vadd.xlane.f32.xlu0 %v1231
        %v1233 = vpop.xlane.xlu0 %1232
        %vm1234 = vcmask 15368
        %1235 = vst.msk [vmem:[#allocation3] sm:$0xff] %vm1234, %v1230
        %1236 = vst.msk [vmem:[#allocation3 + $0x8] sm:$0xff] %vm1234, %v1233
        %s1237 = scalar_lea.vmem %s450, 128 [#allocation4]
        %v1238 = vld [vmem:[%s1237] sm:$0xf]
        %v1239 = vld [vmem:[%s1237 + $0x4] sm:$0xf]
        %v1240 = vld [vmem:[%s1237 + $0x8] sm:$0xf]
        %v1241 = vld [vmem:[%s1237 + $0xc] sm:$0xf]
        %v1242 = vld [vmem:[%s1237 + $0x10] sm:$0xf]
        %v1243 = vld [vmem:[%s1237 + $0x14] sm:$0xf]
        %v1244 = vld [vmem:[%s1237 + $0x18] sm:$0xf]
        %v1245 = vld [vmem:[%s1237 + $0x1c] sm:$0xf]
        %v1246 = vld [vmem:[%s1237 + $0x20] sm:$0xf]
        %v1247 = vld [vmem:[%s1237 + $0x24] sm:$0xf]
        %v1248 = vld [vmem:[%s1237 + $0x28] sm:$0xf]
        %v1249 = vld [vmem:[%s1237 + $0x2c] sm:$0xf]
        %v1250 = vld [vmem:[%s1237 + $0x30] sm:$0xf]
        %v1251 = vld [vmem:[%s1237 + $0x34] sm:$0xf]
        %v1252 = vld [vmem:[%s1237 + $0x38] sm:$0xf]
        %v1253 = vld [vmem:[%s1237 + $0x3c] sm:$0xf]
        %v1270 = vunpack.c.l.b16 %v1238
        %v1271 = vunpack.c.l.b16 %v1239
        %v1272 = vunpack.c.l.b16 %v1240
        %v1273 = vunpack.c.l.b16 %v1241
        %v1274 = vunpack.c.l.b16 %v1242
        %v1275 = vunpack.c.l.b16 %v1243
        %v1276 = vunpack.c.l.b16 %v1244
        %v1277 = vunpack.c.l.b16 %v1245
        %v1278 = vunpack.c.l.b16 %v1246
        %v1279 = vunpack.c.l.b16 %v1247
        %v1280 = vunpack.c.l.b16 %v1248
        %v1281 = vunpack.c.l.b16 %v1249
        %v1282 = vunpack.c.l.b16 %v1250
        %v1283 = vunpack.c.l.b16 %v1251
        %v1284 = vunpack.c.l.b16 %v1252
        %v1285 = vunpack.c.l.b16 %v1253
        %v1286 = vpack.c.b16 %v1271, %v1270
        %v1287 = vpack.c.b16 %v1273, %v1272
        %v1288 = vpack.c.b16 %v1275, %v1274
        %v1289 = vpack.c.b16 %v1277, %v1276
        %v1290 = vpack.c.b16 %v1279, %v1278
        %v1291 = vpack.c.b16 %v1281, %v1280
        %v1292 = vpack.c.b16 %v1283, %v1282
        %v1293 = vpack.c.b16 %v1285, %v1284
        %v1295 = vsel %vm690, %v1286, 0
        %v1298 = vsel %vm690, %v1287, 0
        %v1301 = vsel %vm690, %v1288, 0
        %v1304 = vsel %vm690, %v1289, 0
        %v1307 = vsel %vm690, %v1290, 0
        %v1310 = vsel %vm690, %v1291, 0
        %v1313 = vsel %vm690, %v1292, 0
        %v1316 = vsel %vm690, %v1293, 0
        %1318 = vmatprep.subr.bf16.mxu0 0
        %1319 = vmatpush1.bf16.msra.mxu0 %v684
        %1320 = vmatprep.subr.bf16.mxu0 0
        %1321 = vmatpush1.bf16.msra.mxu0 %v685
        %1322 = vmatprep.subr.bf16.mxu0 0
        %1323 = vmatpush1.bf16.msra.mxu0 %v686
        %1324 = vmatprep.subr.bf16.mxu0 0
        %1325 = vmatpush1.bf16.msra.mxu0 0
        %1326 = vmatprep.subr.bf16.mxu0 0
        %1327 = vmatpush1.bf16.msra.mxu0 0
        %1328 = vmatprep.subr.bf16.mxu0 0
        %1329 = vmatpush1.bf16.msra.mxu0 0
        %1330 = vmatprep.subr.bf16.mxu0 0
        %1331 = vmatpush1.bf16.msra.mxu0 0
        %1332 = vmatprep.subr.bf16.mxu0 0
        %1333 = vmatpush1.bf16.msra.mxu0 0
        %1334 = vmatprep.subr.bf16.mxu0 0
        %1335 = vmatpush1.bf16.msra.mxu0 0
        %1336 = vmatprep.subr.bf16.mxu0 0
        %1337 = vmatpush1.bf16.msra.mxu0 0
        %1338 = vmatprep.subr.bf16.mxu0 0
        %1339 = vmatpush1.bf16.msra.mxu0 0
        %1340 = vmatprep.subr.bf16.mxu0 0
        %1341 = vmatpush1.bf16.msra.mxu0 0
        %1342 = vmatprep.subr.bf16.mxu0 0
        %1343 = vmatpush1.bf16.msra.mxu0 0
        %1344 = vmatprep.subr.bf16.mxu0 0
        %1345 = vmatpush1.bf16.msra.mxu0 0
        %1346 = vmatprep.subr.bf16.mxu0 0
        %1347 = vmatpush1.bf16.msra.mxu0 0
        %1348 = vmatprep.subr.bf16.mxu0 0
        %1349 = vmatpush1.bf16.msra.mxu0 0
        %1350 = vmatprep.mubr.bf16.mxu0 0
        %1351 = vmatmul.mubr.bf16.gmra.mrb[0].mxu0 %v1295
        %v1352 = vpop.f32.mrb[0].mxu0
        %v1353 = vadd.f32 0.0, %v1352
        %v1354 = vpop.f32.mrb[0].mxu0
        %v1355 = vpop.f32.mrb[0].mxu0
        %v1356 = vadd.f32 0.0, %v1355
        %v1357 = vpop.f32.mrb[0].mxu0
        %1358 = vmatprep.mubr.bf16.mxu0 0
        %1359 = vmatmul.mubr.bf16.gmra.mrb[0].mxu0 %v1298
        %v1360 = vpop.f32.mrb[0].mxu0
        %v1361 = vadd.f32 0.0, %v1360
        %v1362 = vpop.f32.mrb[0].mxu0
        %v1363 = vpop.f32.mrb[0].mxu0
        %v1364 = vadd.f32 0.0, %v1363
        %v1365 = vpop.f32.mrb[0].mxu0
        %1366 = vmatprep.mubr.bf16.mxu0 0
        %1367 = vmatmul.mubr.bf16.gmra.mrb[0].mxu0 %v1301
        %v1368 = vpop.f32.mrb[0].mxu0
        %v1369 = vadd.f32 0.0, %v1368
        %v1370 = vpop.f32.mrb[0].mxu0
        %v1371 = vpop.f32.mrb[0].mxu0
        %v1372 = vadd.f32 0.0, %v1371
        %v1373 = vpop.f32.mrb[0].mxu0
        %1374 = vmatprep.mubr.bf16.mxu0 0
        %1375 = vmatmul.mubr.bf16.gmra.mrb[0].mxu0 %v1304
        %v1376 = vpop.f32.mrb[0].mxu0
        %v1377 = vadd.f32 0.0, %v1376
        %v1378 = vpop.f32.mrb[0].mxu0
        %v1379 = vpop.f32.mrb[0].mxu0
        %v1380 = vadd.f32 0.0, %v1379
        %v1381 = vpop.f32.mrb[0].mxu0
        %1382 = vmatprep.mubr.bf16.mxu0 0
        %1383 = vmatmul.mubr.bf16.gmra.mrb[0].mxu0 %v1307
        %v1384 = vpop.f32.mrb[0].mxu0
        %v1385 = vadd.f32 0.0, %v1384
        %v1386 = vpop.f32.mrb[0].mxu0
        %v1387 = vpop.f32.mrb[0].mxu0
        %v1388 = vadd.f32 0.0, %v1387
        %v1389 = vpop.f32.mrb[0].mxu0
        %1390 = vmatprep.mubr.bf16.mxu0 0
        %1391 = vmatmul.mubr.bf16.gmra.mrb[0].mxu0 %v1310
        %v1392 = vpop.f32.mrb[0].mxu0
        %v1393 = vadd.f32 0.0, %v1392
        %v1394 = vpop.f32.mrb[0].mxu0
        %v1395 = vpop.f32.mrb[0].mxu0
        %v1396 = vadd.f32 0.0, %v1395
        %v1397 = vpop.f32.mrb[0].mxu0
        %1398 = vmatprep.mubr.bf16.mxu0 0
        %1399 = vmatmul.mubr.bf16.gmra.mrb[0].mxu0 %v1313
        %v1400 = vpop.f32.mrb[0].mxu0
        %v1401 = vadd.f32 0.0, %v1400
        %v1402 = vpop.f32.mrb[0].mxu0
        %v1403 = vpop.f32.mrb[0].mxu0
        %v1404 = vadd.f32 0.0, %v1403
        %v1405 = vpop.f32.mrb[0].mxu0
        %1406 = vmatprep.mubr.bf16.mxu0 0
        %1407 = vmatmul.mubr.bf16.gmra.mrb[0].mxu0 %v1316
        %v1408 = vpop.f32.mrb[0].mxu0
        %v1409 = vadd.f32 0.0, %v1408
        %v1410 = vpop.f32.mrb[0].mxu0
        %v1411 = vpop.f32.mrb[0].mxu0
        %v1412 = vadd.f32 0.0, %v1411
        %v1413 = vpop.f32.mrb[0].mxu0
        %1414 = vdwg.mxu0
        %s1415 = scalar_lea.vmem %s458, 16 [#allocation6]
        %v1416 = vld [vmem:[%s1415] sm:$0xf]
        %v1417 = vld [vmem:[%s1415 + $0x4] sm:$0xf]
        %v1418 = vunpack.c.l.bf16 %v1416
        %v1419 = vunpack.c.l.bf16 %v1417
        %v1420 = vsub.f32 %v1418, 1.0
        %v1421 = vsub.f32 %v1419, 1.0
        %v1422 = vmul.f32 %v1420, 1e+09
        %v1423 = vmul.f32 %v1421, 1e+09
        %1425 = vset.pattern.permute.xlu0 0
        %1426 = vperm.xlu0 %1425, %v1422
        %v1427 = vpop.permute.xlu0 %1426
        %1430 = vset.pattern.permute.xlu0 0
        %1431 = vperm.xlu0 %1430, %v1423
        %v1432 = vpop.permute.xlu0 %1431
        %v1434 = vadd.f32 %v1353, %v1427
        %v1435 = vadd.f32 %v1356, %v1432
        %1436 = vset.pattern.permute.xlu0 1
        %1437 = vperm.xlu0 %1436, %v1422
        %v1438 = vpop.permute.xlu0 %1437
        %1440 = vset.pattern.permute.xlu0 1
        %1441 = vperm.xlu0 %1440, %v1423
        %v1442 = vpop.permute.xlu0 %1441
        %v1444 = vadd.f32 %v1361, %v1438
        %v1445 = vadd.f32 %v1364, %v1442
        %v1446 = vmax.f32 %v1434, %v1444
        %v1447 = vmax.f32 %v1435, %v1445
        %1448 = vset.pattern.permute.xlu0 2
        %1449 = vperm.xlu0 %1448, %v1422
        %v1450 = vpop.permute.xlu0 %1449
        %1452 = vset.pattern.permute.xlu0 2
        %1453 = vperm.xlu0 %1452, %v1423
        %v1454 = vpop.permute.xlu0 %1453
        %v1456 = vadd.f32 %v1369, %v1450
        %v1457 = vadd.f32 %v1372, %v1454
        %v1458 = vmax.f32 %v1446, %v1456
        %v1459 = vmax.f32 %v1447, %v1457
        %1460 = vset.pattern.permute.xlu0 3
        %1461 = vperm.xlu0 %1460, %v1422
        %v1462 = vpop.permute.xlu0 %1461
        %1464 = vset.pattern.permute.xlu0 3
        %1465 = vperm.xlu0 %1464, %v1423
        %v1466 = vpop.permute.xlu0 %1465
        %v1468 = vadd.f32 %v1377, %v1462
        %v1469 = vadd.f32 %v1380, %v1466
        %v1470 = vmax.f32 %v1458, %v1468
        %v1471 = vmax.f32 %v1459, %v1469
        %1472 = vset.pattern.permute.xlu0 4
        %1473 = vperm.xlu0 %1472, %v1422
        %v1474 = vpop.permute.xlu0 %1473
        %1476 = vset.pattern.permute.xlu0 4
        %1477 = vperm.xlu0 %1476, %v1423
        %v1478 = vpop.permute.xlu0 %1477
        %v1480 = vadd.f32 %v1385, %v1474
        %v1481 = vadd.f32 %v1388, %v1478
        %v1482 = vmax.f32 %v1470, %v1480
        %v1483 = vmax.f32 %v1471, %v1481
        %1484 = vset.pattern.permute.xlu0 5
        %1485 = vperm.xlu0 %1484, %v1422
        %v1486 = vpop.permute.xlu0 %1485
        %1488 = vset.pattern.permute.xlu0 5
        %1489 = vperm.xlu0 %1488, %v1423
        %v1490 = vpop.permute.xlu0 %1489
        %v1492 = vadd.f32 %v1393, %v1486
        %v1493 = vadd.f32 %v1396, %v1490
        %v1494 = vmax.f32 %v1482, %v1492
        %v1495 = vmax.f32 %v1483, %v1493
        %1496 = vset.pattern.permute.xlu0 6
        %1497 = vperm.xlu0 %1496, %v1422
        %v1498 = vpop.permute.xlu0 %1497
        %1500 = vset.pattern.permute.xlu0 6
        %1501 = vperm.xlu0 %1500, %v1423
        %v1502 = vpop.permute.xlu0 %1501
        %v1504 = vadd.f32 %v1401, %v1498
        %v1505 = vadd.f32 %v1404, %v1502
        %v1506 = vmax.f32 %v1494, %v1504
        %v1507 = vmax.f32 %v1495, %v1505
        %1508 = vset.pattern.permute.xlu0 7
        %1509 = vperm.xlu0 %1508, %v1422
        %v1510 = vpop.permute.xlu0 %1509
        %1512 = vset.pattern.permute.xlu0 7
        %1513 = vperm.xlu0 %1512, %v1423
        %v1514 = vpop.permute.xlu0 %1513
        %v1516 = vadd.f32 %v1409, %v1510
        %v1517 = vadd.f32 %v1412, %v1514
        %v1518 = vmax.f32 %v1506, %v1516
        %v1519 = vmax.f32 %v1507, %v1517
        %v1520 = vadd.f32 %v1518, %v920
        %v1521 = vadd.f32 %v1519, %v920
        %s1522 = scalar_lea.vmem [#allocation2], 32
        %1523 = vst.msk [vmem:[%s1522] sm:$0xff] %vm924, %v1520
        %1524 = vst.msk [vmem:[%s1522 + $0x8] sm:$0xff] %vm924, %v1521
        %v1525 = vmul.f32 %v1520, %v540
        %v1526 = vmul.f32 %v1521, %v541
        %v1527 = vsel %vm924, %v1525, 0.0
        %1528 = vadd.xlane.f32.xlu0 %v1527
        %v1529 = vpop.xlane.xlu0 %1528
        %v1530 = vsel %vm924, %v1526, 0.0
        %1531 = vadd.xlane.f32.xlu0 %v1530
        %v1532 = vpop.xlane.xlu0 %1531
        %vm1533 = vcmask 23568
        %1534 = vst.msk [vmem:[#allocation3] sm:$0xff] %vm1533, %v1529
        %1535 = vst.msk [vmem:[#allocation3 + $0x8] sm:$0xff] %vm1533, %v1532
        %s1536 = scalar_lea.vmem %s450, 192 [#allocation4]
        %v1537 = vld [vmem:[%s1536] sm:$0xf]
        %v1538 = vld [vmem:[%s1536 + $0x4] sm:$0xf]
        %v1539 = vld [vmem:[%s1536 + $0x8] sm:$0xf]
        %v1540 = vld [vmem:[%s1536 + $0xc] sm:$0xf]
        %v1541 = vld [vmem:[%s1536 + $0x10] sm:$0xf]
        %v1542 = vld [vmem:[%s1536 + $0x14] sm:$0xf]
        %v1543 = vld [vmem:[%s1536 + $0x18] sm:$0xf]
        %v1544 = vld [vmem:[%s1536 + $0x1c] sm:$0xf]
        %v1545 = vld [vmem:[%s1536 + $0x20] sm:$0xf]
        %v1546 = vld [vmem:[%s1536 + $0x24] sm:$0xf]
        %v1547 = vld [vmem:[%s1536 + $0x28] sm:$0xf]
        %v1548 = vld [vmem:[%s1536 + $0x2c] sm:$0xf]
        %v1549 = vld [vmem:[%s1536 + $0x30] sm:$0xf]
        %v1550 = vld [vmem:[%s1536 + $0x34] sm:$0xf]
        %v1551 = vld [vmem:[%s1536 + $0x38] sm:$0xf]
        %v1552 = vld [vmem:[%s1536 + $0x3c] sm:$0xf]
        %v1569 = vunpack.c.l.b16 %v1537
        %v1570 = vunpack.c.l.b16 %v1538
        %v1571 = vunpack.c.l.b16 %v1539
        %v1572 = vunpack.c.l.b16 %v1540
        %v1573 = vunpack.c.l.b16 %v1541
        %v1574 = vunpack.c.l.b16 %v1542
        %v1575 = vunpack.c.l.b16 %v1543
        %v1576 = vunpack.c.l.b16 %v1544
        %v1577 = vunpack.c.l.b16 %v1545
        %v1578 = vunpack.c.l.b16 %v1546
        %v1579 = vunpack.c.l.b16 %v1547
        %v1580 = vunpack.c.l.b16 %v1548
        %v1581 = vunpack.c.l.b16 %v1549
        %v1582 = vunpack.c.l.b16 %v1550
        %v1583 = vunpack.c.l.b16 %v1551
        %v1584 = vunpack.c.l.b16 %v1552
        %v1585 = vpack.c.b16 %v1570, %v1569
        %v1586 = vpack.c.b16 %v1572, %v1571
        %v1587 = vpack.c.b16 %v1574, %v1573
        %v1588 = vpack.c.b16 %v1576, %v1575
        %v1589 = vpack.c.b16 %v1578, %v1577
        %v1590 = vpack.c.b16 %v1580, %v1579
        %v1591 = vpack.c.b16 %v1582, %v1581
        %v1592 = vpack.c.b16 %v1584, %v1583
        %v1594 = vsel %vm690, %v1585, 0
        %v1597 = vsel %vm690, %v1586, 0
        %v1600 = vsel %vm690, %v1587, 0
        %v1603 = vsel %vm690, %v1588, 0
        %v1606 = vsel %vm690, %v1589, 0
        %v1609 = vsel %vm690, %v1590, 0
        %v1612 = vsel %vm690, %v1591, 0
        %v1615 = vsel %vm690, %v1592, 0
        %1617 = vmatprep.subr.bf16.mxu0 0
        %1618 = vmatpush1.bf16.msra.mxu0 %v684
        %1619 = vmatprep.subr.bf16.mxu0 0
        %1620 = vmatpush1.bf16.msra.mxu0 %v685
        %1621 = vmatprep.subr.bf16.mxu0 0
        %1622 = vmatpush1.bf16.msra.mxu0 %v686
        %1623 = vmatprep.subr.bf16.mxu0 0
        %1624 = vmatpush1.bf16.msra.mxu0 0
        %1625 = vmatprep.subr.bf16.mxu0 0
        %1626 = vmatpush1.bf16.msra.mxu0 0
        %1627 = vmatprep.subr.bf16.mxu0 0
        %1628 = vmatpush1.bf16.msra.mxu0 0
        %1629 = vmatprep.subr.bf16.mxu0 0
        %1630 = vmatpush1.bf16.msra.mxu0 0
        %1631 = vmatprep.subr.bf16.mxu0 0
        %1632 = vmatpush1.bf16.msra.mxu0 0
        %1633 = vmatprep.subr.bf16.mxu0 0
        %1634 = vmatpush1.bf16.msra.mxu0 0
        %1635 = vmatprep.subr.bf16.mxu0 0
        %1636 = vmatpush1.bf16.msra.mxu0 0
        %1637 = vmatprep.subr.bf16.mxu0 0
        %1638 = vmatpush1.bf16.msra.mxu0 0
        %1639 = vmatprep.subr.bf16.mxu0 0
        %1640 = vmatpush1.bf16.msra.mxu0 0
        %1641 = vmatprep.subr.bf16.mxu0 0
        %1642 = vmatpush1.bf16.msra.mxu0 0
        %1643 = vmatprep.subr.bf16.mxu0 0
        %1644 = vmatpush1.bf16.msra.mxu0 0
        %1645 = vmatprep.subr.bf16.mxu0 0
        %1646 = vmatpush1.bf16.msra.mxu0 0
        %1647 = vmatprep.subr.bf16.mxu0 0
        %1648 = vmatpush1.bf16.msra.mxu0 0
        %1649 = vmatprep.mubr.bf16.mxu0 0
        %1650 = vmatmul.mubr.bf16.gmra.mrb[0].mxu0 %v1594
        %v1651 = vpop.f32.mrb[0].mxu0
        %v1652 = vadd.f32 0.0, %v1651
        %v1653 = vpop.f32.mrb[0].mxu0
        %v1654 = vpop.f32.mrb[0].mxu0
        %v1655 = vadd.f32 0.0, %v1654
        %v1656 = vpop.f32.mrb[0].mxu0
        %1657 = vmatprep.mubr.bf16.mxu0 0
        %1658 = vmatmul.mubr.bf16.gmra.mrb[0].mxu0 %v1597
        %v1659 = vpop.f32.mrb[0].mxu0
        %v1660 = vadd.f32 0.0, %v1659
        %v1661 = vpop.f32.mrb[0].mxu0
        %v1662 = vpop.f32.mrb[0].mxu0
        %v1663 = vadd.f32 0.0, %v1662
        %v1664 = vpop.f32.mrb[0].mxu0
        %1665 = vmatprep.mubr.bf16.mxu0 0
        %1666 = vmatmul.mubr.bf16.gmra.mrb[0].mxu0 %v1600
        %v1667 = vpop.f32.mrb[0].mxu0
        %v1668 = vadd.f32 0.0, %v1667
        %v1669 = vpop.f32.mrb[0].mxu0
        %v1670 = vpop.f32.mrb[0].mxu0
        %v1671 = vadd.f32 0.0, %v1670
        %v1672 = vpop.f32.mrb[0].mxu0
        %1673 = vmatprep.mubr.bf16.mxu0 0
        %1674 = vmatmul.mubr.bf16.gmra.mrb[0].mxu0 %v1603
        %v1675 = vpop.f32.mrb[0].mxu0
        %v1676 = vadd.f32 0.0, %v1675
        %v1677 = vpop.f32.mrb[0].mxu0
        %v1678 = vpop.f32.mrb[0].mxu0
        %v1679 = vadd.f32 0.0, %v1678
        %v1680 = vpop.f32.mrb[0].mxu0
        %1681 = vmatprep.mubr.bf16.mxu0 0
        %1682 = vmatmul.mubr.bf16.gmra.mrb[0].mxu0 %v1606
        %v1683 = vpop.f32.mrb[0].mxu0
        %v1684 = vadd.f32 0.0, %v1683
        %v1685 = vpop.f32.mrb[0].mxu0
        %v1686 = vpop.f32.mrb[0].mxu0
        %v1687 = vadd.f32 0.0, %v1686
        %v1688 = vpop.f32.mrb[0].mxu0
        %1689 = vmatprep.mubr.bf16.mxu0 0
        %1690 = vmatmul.mubr.bf16.gmra.mrb[0].mxu0 %v1609
        %v1691 = vpop.f32.mrb[0].mxu0
        %v1692 = vadd.f32 0.0, %v1691
        %v1693 = vpop.f32.mrb[0].mxu0
        %v1694 = vpop.f32.mrb[0].mxu0
        %v1695 = vadd.f32 0.0, %v1694
        %v1696 = vpop.f32.mrb[0].mxu0
        %1697 = vmatprep.mubr.bf16.mxu0 0
        %1698 = vmatmul.mubr.bf16.gmra.mrb[0].mxu0 %v1612
        %v1699 = vpop.f32.mrb[0].mxu0
        %v1700 = vadd.f32 0.0, %v1699
        %v1701 = vpop.f32.mrb[0].mxu0
        %v1702 = vpop.f32.mrb[0].mxu0
        %v1703 = vadd.f32 0.0, %v1702
        %v1704 = vpop.f32.mrb[0].mxu0
        %1705 = vmatprep.mubr.bf16.mxu0 0
        %1706 = vmatmul.mubr.bf16.gmra.mrb[0].mxu0 %v1615
        %v1707 = vpop.f32.mrb[0].mxu0
        %v1708 = vadd.f32 0.0, %v1707
        %v1709 = vpop.f32.mrb[0].mxu0
        %v1710 = vpop.f32.mrb[0].mxu0
        %v1711 = vadd.f32 0.0, %v1710
        %v1712 = vpop.f32.mrb[0].mxu0
        %1713 = vdwg.mxu0
        %s1714 = scalar_lea.vmem %s458, 24 [#allocation6]
        %v1715 = vld [vmem:[%s1714] sm:$0xf]
        %v1716 = vld [vmem:[%s1714 + $0x4] sm:$0xf]
        %v1717 = vunpack.c.l.bf16 %v1715
        %v1718 = vunpack.c.l.bf16 %v1716
        %v1719 = vsub.f32 %v1717, 1.0
        %v1720 = vsub.f32 %v1718, 1.0
        %v1721 = vmul.f32 %v1719, 1e+09
        %v1722 = vmul.f32 %v1720, 1e+09
        %1724 = vset.pattern.permute.xlu0 0
        %1725 = vperm.xlu0 %1724, %v1721
        %v1726 = vpop.permute.xlu0 %1725
        %1729 = vset.pattern.permute.xlu0 0
        %1730 = vperm.xlu0 %1729, %v1722
        %v1731 = vpop.permute.xlu0 %1730
        %v1733 = vadd.f32 %v1652, %v1726
        %v1734 = vadd.f32 %v1655, %v1731
        %1735 = vset.pattern.permute.xlu0 1
        %1736 = vperm.xlu0 %1735, %v1721
        %v1737 = vpop.permute.xlu0 %1736
        %1739 = vset.pattern.permute.xlu0 1
        %1740 = vperm.xlu0 %1739, %v1722
        %v1741 = vpop.permute.xlu0 %1740
        %v1743 = vadd.f32 %v1660, %v1737
        %v1744 = vadd.f32 %v1663, %v1741
        %v1745 = vmax.f32 %v1733, %v1743
        %v1746 = vmax.f32 %v1734, %v1744
        %1747 = vset.pattern.permute.xlu0 2
        %1748 = vperm.xlu0 %1747, %v1721
        %v1749 = vpop.permute.xlu0 %1748
        %1751 = vset.pattern.permute.xlu0 2
        %1752 = vperm.xlu0 %1751, %v1722
        %v1753 = vpop.permute.xlu0 %1752
        %v1755 = vadd.f32 %v1668, %v1749
        %v1756 = vadd.f32 %v1671, %v1753
        %v1757 = vmax.f32 %v1745, %v1755
        %v1758 = vmax.f32 %v1746, %v1756
        %1759 = vset.pattern.permute.xlu0 3
        %1760 = vperm.xlu0 %1759, %v1721
        %v1761 = vpop.permute.xlu0 %1760
        %1763 = vset.pattern.permute.xlu0 3
        %1764 = vperm.xlu0 %1763, %v1722
        %v1765 = vpop.permute.xlu0 %1764
        %v1767 = vadd.f32 %v1676, %v1761
        %v1768 = vadd.f32 %v1679, %v1765
        %v1769 = vmax.f32 %v1757, %v1767
        %v1770 = vmax.f32 %v1758, %v1768
        %1771 = vset.pattern.permute.xlu0 4
        %1772 = vperm.xlu0 %1771, %v1721
        %v1773 = vpop.permute.xlu0 %1772
        %1775 = vset.pattern.permute.xlu0 4
        %1776 = vperm.xlu0 %1775, %v1722
        %v1777 = vpop.permute.xlu0 %1776
        %v1779 = vadd.f32 %v1684, %v1773
        %v1780 = vadd.f32 %v1687, %v1777
        %v1781 = vmax.f32 %v1769, %v1779
        %v1782 = vmax.f32 %v1770, %v1780
        %1783 = vset.pattern.permute.xlu0 5
        %1784 = vperm.xlu0 %1783, %v1721
        %v1785 = vpop.permute.xlu0 %1784
        %1787 = vset.pattern.permute.xlu0 5
        %1788 = vperm.xlu0 %1787, %v1722
        %v1789 = vpop.permute.xlu0 %1788
        %v1791 = vadd.f32 %v1692, %v1785
        %v1792 = vadd.f32 %v1695, %v1789
        %v1793 = vmax.f32 %v1781, %v1791
        %v1794 = vmax.f32 %v1782, %v1792
        %1795 = vset.pattern.permute.xlu0 6
        %1796 = vperm.xlu0 %1795, %v1721
        %v1797 = vpop.permute.xlu0 %1796
        %1799 = vset.pattern.permute.xlu0 6
        %1800 = vperm.xlu0 %1799, %v1722
        %v1801 = vpop.permute.xlu0 %1800
        %v1803 = vadd.f32 %v1700, %v1797
        %v1804 = vadd.f32 %v1703, %v1801
        %v1805 = vmax.f32 %v1793, %v1803
        %v1806 = vmax.f32 %v1794, %v1804
        %1807 = vset.pattern.permute.xlu0 7
        %1808 = vperm.xlu0 %1807, %v1721
        %v1809 = vpop.permute.xlu0 %1808
        %1811 = vset.pattern.permute.xlu0 7
        %1812 = vperm.xlu0 %1811, %v1722
        %v1813 = vpop.permute.xlu0 %1812
        %v1815 = vadd.f32 %v1708, %v1809
        %v1816 = vadd.f32 %v1711, %v1813
        %v1817 = vmax.f32 %v1805, %v1815
        %v1818 = vmax.f32 %v1806, %v1816
        %v1819 = vadd.f32 %v1817, %v920
        %v1820 = vadd.f32 %v1818, %v920
        %s1821 = scalar_lea.vmem [#allocation2], 48
        %1822 = vst.msk [vmem:[%s1821] sm:$0xff] %vm924, %v1819
        %1823 = vst.msk [vmem:[%s1821 + $0x8] sm:$0xff] %vm924, %v1820
        %v1824 = vmul.f32 %v1819, %v540
        %v1825 = vmul.f32 %v1820, %v541
        %v1826 = vsel %vm924, %v1824, 0.0
        %1827 = vadd.xlane.f32.xlu0 %v1826
        %v1828 = vpop.xlane.xlu0 %1827
        %v1829 = vsel %vm924, %v1825, 0.0
        %1830 = vadd.xlane.f32.xlu0 %v1829
        %v1831 = vpop.xlane.xlu0 %1830
        %vm1832 = vcmask 31768
        %1833 = vst.msk [vmem:[#allocation3] sm:$0xff] %vm1832, %v1828
        %1834 = vst.msk [vmem:[#allocation3 + $0x8] sm:$0xff] %vm1832, %v1831
        %v1835 = vld [vmem:[%s529] sm:$0xff]
        %v1836 = vld [vmem:[%s529 + $0x8] sm:$0xff]
        %vm1837 = vcmp.gt.f32.partialorder %v1835, 0.0
        %vm1838 = vcmp.gt.f32.partialorder %v1836, 0.0
        %v1839 = vld [vmem:[#allocation3] sm:$0xff]
        %v1840 = vld [vmem:[#allocation3 + $0x8] sm:$0xff]
        %v1841 = vsel %vm1837, %v1839, -1e+09
        %v1842 = vsel %vm1838, %v1840, -1e+09
        %vm1843 = vcmask 31744
        %v1844 = vsel %vm1843, %v1841, -inf
        %1845 = vmax.xlane.f32.xlu0 %v1844
        %v1846 = vpop.xlane.xlu0 %1845
        %v1847 = vsel %vm1843, %v1842, -inf
        %1848 = vmax.xlane.f32.xlu0 %v1847
        %v1849 = vpop.xlane.xlu0 %1848
        %v1850 = vsub.f32 %v1841, %v1846
        %v1851 = vsub.f32 %v1842, %v1849
        %v1852 = vmul.f32 %v1850, 1.442695
        %v1853 = vpow.pop %v1852
        %v1854 = vmul.f32 %v1851, 1.442695
        %v1855 = vpow.pop %v1854
        %v1856 = vsel %vm1843, %v1853, 0.0
        %1857 = vadd.xlane.f32.xlu0 %v1856
        %v1858 = vpop.xlane.xlu0 %1857
        %v1859 = vsel %vm1843, %v1855, 0.0
        %1860 = vadd.xlane.f32.xlu0 %v1859
        %v1861 = vpop.xlane.xlu0 %1860
        %v1862 = vrcp.pop %v1858
        %v1863 = vrcp.pop %v1861
        %v1864 = vmul.f32 %v1853, %v1862
        %v1865 = vmul.f32 %v1855, %v1863
        %v1866 = vld [vmem:[#allocation2] sm:$0xff]
        %v1867 = vld [vmem:[#allocation2 + $0x8] sm:$0xff]
        %1869 = vset.pattern.permute.xlu0 0
        %1870 = vperm.xlu0 %1869, %v1864
        %v1871 = vpop.permute.xlu0 %1870
        %1874 = vset.pattern.permute.xlu0 0
        %1875 = vperm.xlu0 %1874, %v1865
        %v1876 = vpop.permute.xlu0 %1875
        %v1878 = vmul.f32 %v1871, %v1866
        %v1879 = vmul.f32 %v1876, %v1867
        %v1880 = vadd.f32 %v1878, 0.0
        %v1881 = vadd.f32 %v1879, 0.0
        %v1882 = vld [vmem:[%s1223] sm:$0xff]
        %v1883 = vld [vmem:[%s1223 + $0x8] sm:$0xff]
        %1884 = vset.pattern.permute.xlu0 1
        %1885 = vperm.xlu0 %1884, %v1864
        %v1886 = vpop.permute.xlu0 %1885
        %1888 = vset.pattern.permute.xlu0 1
        %1889 = vperm.xlu0 %1888, %v1865
        %v1890 = vpop.permute.xlu0 %1889
        %v1892 = vmul.f32 %v1886, %v1882
        %v1893 = vmul.f32 %v1890, %v1883
        %v1894 = vadd.f32 %v1880, %v1892
        %v1895 = vadd.f32 %v1881, %v1893
        %v1896 = vld [vmem:[%s1522] sm:$0xff]
        %v1897 = vld [vmem:[%s1522 + $0x8] sm:$0xff]
        %1898 = vset.pattern.permute.xlu0 2
        %1899 = vperm.xlu0 %1898, %v1864
        %v1900 = vpop.permute.xlu0 %1899
        %1902 = vset.pattern.permute.xlu0 2
        %1903 = vperm.xlu0 %1902, %v1865
        %v1904 = vpop.permute.xlu0 %1903
        %v1906 = vmul.f32 %v1900, %v1896
        %v1907 = vmul.f32 %v1904, %v1897
        %v1908 = vadd.f32 %v1894, %v1906
        %v1909 = vadd.f32 %v1895, %v1907
        %v1910 = vld [vmem:[%s1821] sm:$0xff]
        %v1911 = vld [vmem:[%s1821 + $0x8] sm:$0xff]
        %1912 = vset.pattern.permute.xlu0 3
        %1913 = vperm.xlu0 %1912, %v1864
        %v1914 = vpop.permute.xlu0 %1913
        %1916 = vset.pattern.permute.xlu0 3
        %1917 = vperm.xlu0 %1916, %v1865
        %v1918 = vpop.permute.xlu0 %1917
        %v1920 = vmul.f32 %v1914, %v1910
        %v1921 = vmul.f32 %v1918, %v1911
        %v1922 = vadd.f32 %v1908, %v1920
        %v1923 = vadd.f32 %v1909, %v1921
        %v1924 = vadd.f32 %v540, %v603
        %v1925 = vadd.f32 %v541, %v606
        %v1926 = vadd.f32 %v1924, %v1922
        %v1927 = vadd.f32 %v1925, %v1923
        %1928 = vst.msk [vmem:[%s535] sm:$0xff] %vm924, %v1926
        %1929 = vst.msk [vmem:[%s535 + $0x8] sm:$0xff] %vm924, %v1927
        %s1930 = smul.u32 2, %s23
        %p1931 = scmp.lt.s32.totalorder %s1930, 5
        %s1932 = scalar_select %p1931, %s1930, 5
        %s1933 = smul.addr %s1932, 8
        %s1934 = scalar_lea.vmem %s9, %s1933
        // Predicated region
        $region102: #{tpu_custom_call.1} parent=92 // pred_check
          %p1935 = pneg %p255
        $region103: #{tpu_custom_call.1} parent=92 // pred_check_branch
          %1937 = sbr.rel (%p1935) target = $region105
        $region104: #{tpu_custom_call.1} parent=92 // pred_region
          %s1938 = smul.u32 2, %s23
        $region105: #{tpu_custom_call.1} parent=92 // pred_fallthru
          _
      $region93: #{tpu_custom_call.1} parent=5 // pred_fallthru
        _
      %p1939 = scmp.le.s32.totalorder 2, %s18
      // Predicated region
      $region106: #{tpu_custom_call.1} parent=5 // pred_check
        %p1940 = pneg %p1939
      $region107: #{tpu_custom_call.1} parent=5 // pred_check_branch
        %1942 = sbr.rel (%p1940) target = $region109
      $region108: #{tpu_custom_call.1} parent=5 // pred_region
        %s1943 = ssub.s32 %s18, 2
        // Predicated region
        $region110: #{tpu_custom_call.1} parent=108 // pred_check
          %p1944 = pneg %p261
        $region111: #{tpu_custom_call.1} parent=108 // pred_check_branch
          %1946 = sbr.rel (%p1944) target = $region113
        $region112: #{tpu_custom_call.1} parent=108 // pred_region
          %s1947 = smul.u32 2, %s24
          %p1948 = scmp.lt.s32.totalorder %s1947, 5
          %s1949 = scalar_select %p1948, %s1947, 5
          %s1950 = smul.addr %s1949, 8
          %s1951 = scalar_lea.vmem %s9, %s1950
        $region113: #{tpu_custom_call.1} parent=108 // pred_fallthru
          _
      $region109: #{tpu_custom_call.1} parent=5 // pred_fallthru
        _
    $region6: #{tpu_custom_call.1} parent=1 // loop_footer
      %s22 = sadd.s32 1, %s18
    $region7: #{tpu_custom_call.1} parent=1 // loop_footer_branch
      %17 = sbr.rel target = $region3
    $region8: #{tpu_custom_call.1} parent=1 // loop_exit
      _
    %1952 = vsyncpa [#allocation5], 1
    %s1953 = scalar_lea.sflag [#allocation5], 1
    %1954 = vsyncpa %s1953, 1

</llo_original>
